<compile_context>
chip_gen: v7x
topology: tpu7x:2x2x1
jax: 0.10.0
libtpu: 0.0.40
codegen_flags: <defaults>
</compile_context>

<pallas_src>
import functools

import jax
import jax.numpy as jnp
from jax import lax
from jax.experimental import pallas as pl
from jax.experimental.pallas import tpu as pltpu


def _round_up(x, m):
    return (x + m - 1) // m * m


# ----------------------------------------------------------------------------
# Fused Pallas kernel
# ----------------------------------------------------------------------------
def _pack_slab(vals):
    """Pack a list of scalar partial sums into lane 0..len-1 of an (1,8,128) slab."""
    lane = lax.broadcasted_iota(jnp.int32, (8, 128), 1)
    sub = lax.broadcasted_iota(jnp.int32, (8, 128), 0)
    slab = jnp.zeros((8, 128), jnp.float32)
    for k, v in enumerate(vals):
        slab = slab + jnp.where((sub == 0) & (lane == k), v, 0.0)
    return slab[None]  # (1, 8, 128)


def _fused_loss_kernel(logits_t_ref,   # (C, B*N)          resident
                       tc_ref,         # (1, B*N) int32    resident
                       iou_ref,        # (1, B*N) f32      resident
                       reg_pred_ref,   # (M, 10)           resident
                       reg_tgt_ref,    # (M, 10)           resident
                       hm_logit_ref,   # (B*Ch, lane_block) per-step tile
                       hm_gt_ref,      # (B*Ch, lane_block) per-step tile
                       out_ref,        # (1, 8, 128) partial-sum slab for this step
                       *, alpha, gamma, hw, lane_block, num_box_dims):
    j = pl.program_id(0)

    # ---------------- CornerNet heatmap focal loss (every grid step) ----------
    x = hm_logit_ref[...].astype(jnp.float32)
    gt = hm_gt_ref[...].astype(jnp.float32)
    col = j * lane_block + lax.broadcasted_iota(jnp.int32, x.shape, 1)
    valid = (col < hw).astype(jnp.float32)          # mask out lane padding
    pred = jnp.clip(jax.nn.sigmoid(x), 0.0001, 1.0 - 0.0001)
    one_m_pred = 1.0 - pred
    one_m_gt = 1.0 - gt
    pos_inds = jnp.where(gt == 1.0, valid, 0.0)
    neg_inds = jnp.where(gt < 1.0, valid, 0.0)
    g2 = one_m_gt * one_m_gt
    neg_w = g2 * g2                                  # (1 - gt)^4 without EUP pow
    pos_loss = jnp.log(pred) * (one_m_pred * one_m_pred) * pos_inds
    neg_loss = jnp.log(one_m_pred) * (pred * pred) * neg_w * neg_inds
    hm_pos = jnp.sum(pos_loss)
    hm_neg = jnp.sum(neg_loss)
    npos = jnp.sum(pos_inds)

    # ---------------- classification + box/vel (step 0 only) ------------------
    @pl.when(j == 0)
    def _():
        # sigmoid focal + IoU-weighted BCE; labels & iou broadcast built in-kernel
        x_cls = logits_t_ref[...].astype(jnp.float32)          # (C, BN)
        iou = iou_ref[...].astype(jnp.float32)                 # (1, BN) -> bcast
        tc = tc_ref[...]                                       # (1, BN) int32
        cls_iota = lax.broadcasted_iota(jnp.int32, x_cls.shape, 0)
        t = (cls_iota == tc).astype(jnp.float32)               # in-kernel one-hot
        p = jax.nn.sigmoid(x_cls)
        q = jnp.clip(p * iou, 0.0, 1.0)                        # avoid log(<0) NaN
        log_q = jnp.maximum(jnp.log(q), -100.0)                # torch BCE log clamp
        log_1mq = jnp.maximum(jnp.log(1.0 - q), -100.0)
        ce = -(t * log_q + (1.0 - t) * log_1mq)
        p_t = p * t + (1.0 - p) * (1.0 - t)
        one_m_pt = 1.0 - p_t
        if float(gamma) == 2.0:
            mod = one_m_pt * one_m_pt
        elif float(gamma).is_integer():
            mod = lax.integer_pow(one_m_pt, int(gamma))
        else:
            mod = one_m_pt ** gamma
        loss = ce * mod
        if alpha >= 0:
            a_t = alpha * t + (1.0 - alpha) * (1.0 - t)
            loss = a_t * loss
        cls_sum = jnp.sum(loss)

        # smooth-L1 (cols < num_box_dims) and L1 velocity (remaining cols)
        rp = reg_pred_ref[...].astype(jnp.float32)
        rt = reg_tgt_ref[...].astype(jnp.float32)
        d = rp - rt
        ad = jnp.abs(d)
        is_box = lax.broadcasted_iota(jnp.int32, rp.shape, 1) < num_box_dims
        sl1 = jnp.where(ad < 1.0, 0.5 * d * d, ad - 0.5)
        sl1_sum = jnp.sum(jnp.where(is_box, sl1, 0.0))
        l1_sum = jnp.sum(jnp.where(is_box, 0.0, ad))

        out_ref[...] = _pack_slab([hm_pos, hm_neg, npos, cls_sum, sl1_sum, l1_sum])

    @pl.when(j != 0)
    def _():
        out_ref[...] = _pack_slab([hm_pos, hm_neg, npos, 0.0, 0.0, 0.0])


def fused_losses(logits_t, tc_row, iou_row, reg_pred, reg_tgt,
                 hm_logits2d, hm_gt2d, *, alpha, gamma, lane_block_target=2048):
    """Single pallas_call computing all reduction sums for the criterion.

    Returns (hm_pos_sum, hm_neg_sum, num_pos, cls_loss_sum, smooth_l1_sum, vel_l1_sum).
    """
    c_cls, bn = logits_t.shape
    m, rd = reg_pred.shape
    r_hm, hw = hm_logits2d.shape

    lane_block = min(_round_up(hw, 128), lane_block_target)
    hw_padded = _round_up(hw, lane_block)
    n_blocks = hw_padded // lane_block
    if hw_padded != hw:
        pad = ((0, 0), (0, hw_padded - hw))
        hm_logits2d = jnp.pad(hm_logits2d, pad)
        hm_gt2d = jnp.pad(hm_gt2d, pad)

    kern = functools.partial(_fused_loss_kernel, alpha=float(alpha),
                             gamma=float(gamma), hw=hw,
                             lane_block=lane_block, num_box_dims=8)

    out = pl.pallas_call(
        kern,
        grid=(n_blocks,),
        in_specs=[
            pl.BlockSpec((c_cls, bn), lambda j: (0, 0)),        # resident
            pl.BlockSpec((1, bn), lambda j: (0, 0)),            # resident
            pl.BlockSpec((1, bn), lambda j: (0, 0)),            # resident
            pl.BlockSpec((m, rd), lambda j: (0, 0)),            # resident
            pl.BlockSpec((m, rd), lambda j: (0, 0)),            # resident
            pl.BlockSpec((r_hm, lane_block), lambda j: (0, j)),  # streamed
            pl.BlockSpec((r_hm, lane_block), lambda j: (0, j)),  # streamed
        ],
        out_specs=pl.BlockSpec((1, 8, 128), lambda j: (j, 0, 0)),
        out_shape=jax.ShapeDtypeStruct((n_blocks, 8, 128), jnp.float32),
        compiler_params=pltpu.CompilerParams(
            dimension_semantics=("parallel",)),
    )(logits_t, tc_row, iou_row, reg_pred, reg_tgt, hm_logits2d, hm_gt2d)

    totals = jnp.sum(out, axis=(0, 1))   # (128,)
    return totals[0], totals[1], totals[2], totals[3], totals[4], totals[5]


# ----------------------------------------------------------------------------
# Pure-JAX reference of the same sums (used for an in-script sanity check)
# ----------------------------------------------------------------------------
def _fused_sums_reference(logits_t, tc_row, iou_row, reg_pred, reg_tgt,
                          hm_logits2d, hm_gt2d, *, alpha, gamma):
    x_cls = logits_t.astype(jnp.float32)
    iou = iou_row.astype(jnp.float32)
    t = (jnp.arange(x_cls.shape[0], dtype=jnp.int32)[:, None] == tc_row).astype(jnp.float32)
    p = jax.nn.sigmoid(x_cls)
    q = jnp.clip(p * iou, 0.0, 1.0)
    log_q = jnp.maximum(jnp.log(q), -100.0)
    log_1mq = jnp.maximum(jnp.log(1.0 - q), -100.0)
    ce = -(t * log_q + (1.0 - t) * log_1mq)
    p_t = p * t + (1.0 - p) * (1.0 - t)
    loss = ce * (1.0 - p_t) ** gamma
    if alpha >= 0:
        loss = (alpha * t + (1.0 - alpha) * (1.0 - t)) * loss
    cls_sum = jnp.sum(loss)

    d = reg_pred.astype(jnp.float32) - reg_tgt.astype(jnp.float32)
    ad = jnp.abs(d)
    sl1 = jnp.where(ad < 1.0, 0.5 * d * d, ad - 0.5)
    sl1_sum = jnp.sum(sl1[:, :8])
    l1_sum = jnp.sum(ad[:, 8:])

    x = hm_logits2d.astype(jnp.float32)
    gt = hm_gt2d.astype(jnp.float32)
    pred = jnp.clip(jax.nn.sigmoid(x), 0.0001, 1.0 - 0.0001)
    pos_inds = (gt == 1.0).astype(jnp.float32)
    neg_inds = (gt < 1.0).astype(jnp.float32)
    neg_w = (1.0 - gt) ** 4
    hm_pos = jnp.sum(jnp.log(pred) * (1.0 - pred) ** 2 * pos_inds)
    hm_neg = jnp.sum(jnp.log(1.0 - pred) * pred ** 2 * neg_w * neg_inds)
    npos = jnp.sum(pos_inds)
    return hm_pos, hm_neg, npos, cls_sum, sl1_sum, l1_sum


# ----------------------------------------------------------------------------
# Plain-JAX glue
# ----------------------------------------------------------------------------
def cal_diou_3d(boxes1, boxes2, eps=1e-7):
    # TODO(synk): the repo's cal_diou_3d handles rotated BEV boxes; this is an
    # axis-aligned 3-D DIoU loss approximation (heading angle ignored).
    c1, d1 = boxes1[..., :3], boxes1[..., 3:6]
    c2, d2 = boxes2[..., :3], boxes2[..., 3:6]
    min1, max1 = c1 - d1 / 2.0, c1 + d1 / 2.0
    min2, max2 = c2 - d2 / 2.0, c2 + d2 / 2.0
    inter = jnp.prod(
        jnp.clip(jnp.minimum(max1, max2) - jnp.maximum(min1, min2), 0.0, None), axis=-1)
    vol1 = jnp.prod(d1, axis=-1)
    vol2 = jnp.prod(d2, axis=-1)
    union = vol1 + vol2 - inter + eps
    iou = inter / union
    enc = jnp.maximum(max1, max2) - jnp.minimum(min1, min2)
    c_diag2 = jnp.sum(enc ** 2, axis=-1) + eps
    center_d2 = jnp.sum((c1 - c2) ** 2, axis=-1)
    return 1.0 - iou + center_d2 / c_diag2  # DIoU *loss*, shape (1, M)


def set_criterion_forward(outputs, targets, *, num_classes, focal_alpha, focal_gamma,
                          use_pallas=True):
    pred_logits = outputs['pred_logits']          # (B, N, C)
    B, N, C = pred_logits.shape
    G = targets[0]['labels'].shape[0]

    # num_boxes (no distributed all_reduce here)
    num_boxes = max(float(sum(int(t['labels'].shape[0]) for t in targets)), 1.0)

    # TODO(synk): Hungarian / OTA matcher replaced by a deterministic identity matching
    # (query i <-> gt i per batch); the matcher is a separate module, not part of this one.
    batch_idx = jnp.repeat(jnp.arange(B), G)
    src_idx = jnp.tile(jnp.arange(G), B)

    target_classes_o = jnp.concatenate([t['labels'] for t in targets], axis=0)
    target_boxes = jnp.concatenate([t['gt_boxes'] for t in targets], axis=0)   # (M, 7)
    target_vel = jnp.concatenate([t['gt_vel'] for t in targets], axis=0)       # (M, 2)

    src_boxes = outputs['pred_boxes'][batch_idx, src_idx]                      # (M, 7)
    src_rot = outputs['pred_rot'][batch_idx, src_idx]                          # (M, 2)
    src_vel = outputs['vel'][batch_idx, src_idx]                               # (M, 2)

    M = target_boxes.shape[0]
    grid_size_out = jnp.broadcast_to(targets[0]['grid_size_xyz'][None, :], (M, 3))
    image_size = jnp.broadcast_to(targets[0]['image_size_xyxy_tgt'][0][None, :], (M, 3))
    offset_size = jnp.broadcast_to(targets[0]['offset_size_xyxy_tgt'][0][None, :], (M, 3))

    src_boxes_ = jnp.concatenate(
        [src_boxes[:, :3] / grid_size_out,
         src_boxes[:, 3:6] / grid_size_out,
         src_boxes[:, 6:7]], axis=-1)
    target_boxes_ = jnp.concatenate(
        [(target_boxes[:, :3] - offset_size) / image_size,
         target_boxes[:, 3:6] / image_size,
         target_boxes[:, 6:7]], axis=-1)
    bev_tgt_bbox = jnp.concatenate(
        [target_boxes_[:, :3] * grid_size_out,
         target_boxes_[:, 3:6] * grid_size_out,
         target_boxes[:, 6:7]], axis=-1)

    diou_loss = cal_diou_3d(src_boxes.reshape(1, -1, 7),
                            bev_tgt_bbox.reshape(1, -1, 7))                    # (1, M)

    # ----- classification kernel inputs (lane-dense, no one-hot / tiled iou) -----
    DIoUs = jnp.sqrt((1.0 - diou_loss + 1.0) / 2.0 + 1e-6)                     # (1, M)
    iou_row = jnp.ones((B, N), jnp.float32).at[batch_idx, src_idx].set(
        DIoUs[0]).reshape(1, B * N)
    tc_row = jnp.full((B, N), num_classes, jnp.int32).at[batch_idx, src_idx].set(
        target_classes_o.astype(jnp.int32)).reshape(1, B * N)
    logits_t = jnp.transpose(pred_logits.reshape(B * N, C))                    # (C, B*N)

    # ----- box / velocity regression kernel inputs -----
    code_weight = jnp.array([1., 1., 1., 1., 1., 1., 0.5, 0.5], jnp.float32)
    box_preds_reg = jnp.concatenate([src_boxes_[:, :6], src_rot], axis=-1) * code_weight
    tgt_sin = jnp.sin(target_boxes_[:, -1:])
    tgt_cos = jnp.cos(target_boxes_[:, -1:])
    target_boxes_reg = jnp.concatenate(
        [target_boxes_[:, :6], tgt_sin, tgt_cos], axis=-1) * code_weight
    reg_pred = jnp.concatenate([box_preds_reg, src_vel], axis=-1)              # (M, 10)
    reg_tgt = jnp.concatenate([target_boxes_reg, target_vel], axis=-1)         # (M, 10)

    # ----- heatmap kernel inputs -----
    hm_logits = outputs['heatmaps_pred']           # (B, Ch, H, W), NCHW
    hm_gt = targets[0]['heatmaps']                 # (B, Ch, H, W)
    Bh, Ch, H, W = hm_logits.shape
    hm_logits2d = hm_logits.reshape(Bh * Ch, H * W)
    hm_gt2d = hm_gt.reshape(Bh * Ch, H * W)

    loss_fn = fused_losses if use_pallas else _fused_sums_reference
    hm_pos, hm_neg, npos, cls_sum, sl1_sum, l1_sum = loss_fn(
        logits_t, tc_row, iou_row, reg_pred, reg_tgt, hm_logits2d, hm_gt2d,
        alpha=focal_alpha, gamma=focal_gamma)

    loss_ce = cls_sum / num_boxes
    loss_bbox = sl1_sum / num_boxes
    loss_giou = jnp.sum(diou_loss) / num_boxes
    loss_vel = l1_sum / num_boxes
    loss_hm = jnp.where(npos == 0.0, -hm_neg,
                        -(hm_pos + hm_neg) / jnp.maximum(npos, 1.0))

    return {'loss_ce': loss_ce, 'loss_bbox': loss_bbox, 'loss_giou': loss_giou,
            'loss_vel': loss_vel, 'loss_hm': loss_hm}


# ----------------------------------------------------------------------------
# Example run
# ----------------------------------------------------------------------------
if __name__ == "__main__":
    key = jax.random.PRNGKey(0)
    B, N, C = 2, 64, 3          # batch, queries, classes
    G = 5                       # gt boxes per sample
    Ch, H, W = 3, 48, 48        # heatmap channels / spatial (H*W=2304 -> 2 lane blocks)

    grid_size_xyz = jnp.array([16.0, 16.0, 8.0], jnp.float32)
    pc_min = jnp.array([-8.0, -8.0, -4.0], jnp.float32)
    pc_extent = jnp.array([16.0, 16.0, 8.0], jnp.float32)

    ks = jax.random.split(key, 12)
    pred_logits = jax.random.normal(ks[0], (B, N, C), jnp.float32)
    ctr = jax.random.uniform(ks[1], (B, N, 3), jnp.float32) * grid_size_xyz
    dims = jax.random.uniform(ks[2], (B, N, 3), jnp.float32, minval=0.5, maxval=3.0)
    ang = jax.random.uniform(ks[3], (B, N, 1), jnp.float32, minval=-3.14, maxval=3.14)
    pred_boxes = jnp.concatenate([ctr, dims, ang], axis=-1)
    pred_rot = jax.random.normal(ks[4], (B, N, 2), jnp.float32)
    vel = jax.random.normal(ks[5], (B, N, 2), jnp.float32)
    heatmaps_pred = jax.random.normal(ks[6], (B, Ch, H, W), jnp.float32)

    outputs = {'pred_logits': pred_logits, 'pred_boxes': pred_boxes,
               'pred_rot': pred_rot, 'vel': vel, 'heatmaps_pred': heatmaps_pred}

    targets = []
    for b in range(B):
        kb = jax.random.split(ks[7 + b], 5)
        labels = jax.random.randint(kb[0], (G,), 0, C)
        gt_ctr = pc_min + jax.random.uniform(kb[1], (G, 3), jnp.float32) * pc_extent
        gt_dims = jax.random.uniform(kb[2], (G, 3), jnp.float32, minval=0.5, maxval=3.0)
        gt_ang = jax.random.uniform(kb[3], (G, 1), jnp.float32, minval=-3.14, maxval=3.14)
        gt_boxes = jnp.concatenate([gt_ctr, gt_dims, gt_ang], axis=-1)
        gt_vel = jax.random.normal(kb[4], (G, 2), jnp.float32)
        targets.append({
            'labels': labels,
            'gt_boxes': gt_boxes,
            'gt_vel': gt_vel,
            'grid_size_xyz': grid_size_xyz,
            'image_size_xyxy_tgt': jnp.broadcast_to(pc_extent, (G, 3)),
            'offset_size_xyxy_tgt': jnp.broadcast_to(pc_min, (G, 3)),
        })

    # gt heatmaps: mostly small values in [0, 1), a few exact 1.0 peaks
    hm = jax.random.uniform(ks[9], (B, Ch, H, W), jnp.float32) ** 4
    hm = hm.at[:, :, 4, 4].set(1.0)
    targets[0]['heatmaps'] = hm

    losses = set_criterion_forward(outputs, targets, num_classes=C,
                                   focal_alpha=0.25, focal_gamma=2.0,
                                   use_pallas=True)
    losses = jax.tree_util.tree_map(jax.block_until_ready, losses)

    # sanity check against a pure-JAX implementation of the same math
    ref_losses = set_criterion_forward(outputs, targets, num_classes=C,
                                       focal_alpha=0.25, focal_gamma=2.0,
                                       use_pallas=False)
    for k in losses:
        a = float(losses[k])
        b = float(ref_losses[k])
        assert abs(a - b) <= 1e-2 * max(1.0, abs(b)), f"{k}: pallas={a} ref={b}"

    print("KERNEL_OK")
</pallas_src>

<mosaic_0001>
module attributes {stable_mosaic.version = 11 : i64} {
  func.func @_fused_loss_kernel(%arg0: i32, %arg1: memref<3x128xf32, #tpu.memory_space<vmem>>, %arg2: memref<1x128xi32, #tpu.memory_space<vmem>>, %arg3: memref<1x128xf32, #tpu.memory_space<vmem>>, %arg4: memref<10x10xf32, #tpu.memory_space<vmem>>, %arg5: memref<10x10xf32, #tpu.memory_space<vmem>>, %arg6: memref<6x2048xf32, #tpu.memory_space<vmem>>, %arg7: memref<6x2048xf32, #tpu.memory_space<vmem>>, %arg8: memref<1x8x128xf32, #tpu.memory_space<vmem>>) attributes {dimension_semantics = [#tpu.dimension_semantics<parallel>], iteration_bounds = array<i64: 2>, scalar_prefetch = 0 : i64, scratch_operands = 0 : i64, tpu.core_type = #tpu.core_type<tc>, window_params = [{pipeline_mode = #tpu.pipeline_mode<synchronous>, transform_indices = @transform_0, window_bounds = array<i64: 3, 128>}, {pipeline_mode = #tpu.pipeline_mode<synchronous>, transform_indices = @transform_1, window_bounds = array<i64: 1, 128>}, {pipeline_mode = #tpu.pipeline_mode<synchronous>, transform_indices = @transform_2, window_bounds = array<i64: 1, 128>}, {pipeline_mode = #tpu.pipeline_mode<synchronous>, transform_indices = @transform_3, window_bounds = array<i64: 10, 10>}, {pipeline_mode = #tpu.pipeline_mode<synchronous>, transform_indices = @transform_4, window_bounds = array<i64: 10, 10>}, {transform_indices = @transform_5, window_bounds = array<i64: 6, 2048>}, {transform_indices = @transform_6, window_bounds = array<i64: 6, 2048>}, {transform_indices = @transform_7, window_bounds = array<i64: 1, 8, 128>}]} {
    %c0 = arith.constant 0 : index
    %c0_0 = arith.constant 0 : index
    %0 = vector.load %arg6[%c0, %c0_0] : memref<6x2048xf32, #tpu.memory_space<vmem>>, vector<6x2048xf32>
    %c0_1 = arith.constant 0 : index
    %c0_2 = arith.constant 0 : index
    %1 = vector.load %arg7[%c0_1, %c0_2] : memref<6x2048xf32, #tpu.memory_space<vmem>>, vector<6x2048xf32>
    %c2048_i32 = arith.constant 2048 : i32
    %2 = arith.muli %arg0, %c2048_i32 : i32
    %3 = tpu.iota {dimensions = array<i32: 1>} : vector<6x2048xi32>
    %4 = vector.broadcast %2 : i32 to vector<6x2048xi32>
    %5 = arith.addi %4, %3 : vector<6x2048xi32>
    %c2304_i32 = arith.constant 2304 : i32
    %6 = vector.broadcast %c2304_i32 : i32 to vector<6x2048xi32>
    %7 = arith.cmpi slt, %5, %6 : vector<6x2048xi32>
    %8 = arith.extui %7 : vector<6x2048xi1> to vector<6x2048xi32>
    %9 = arith.sitofp %8 : vector<6x2048xi32> to vector<6x2048xf32>
    %10 = arith.negf %0 : vector<6x2048xf32>
    %11 = math.exp %10 : vector<6x2048xf32>
    %cst = arith.constant 1.000000e+00 : f32
    %12 = vector.broadcast %cst : f32 to vector<6x2048xf32>
    %13 = arith.addf %12, %11 : vector<6x2048xf32>
    %14 = arith.divf %12, %13 : vector<6x2048xf32>
    %cst_3 = arith.constant 9.99999974E-5 : f32
    %cst_4 = arith.constant 0.999899983 : f32
    %15 = vector.broadcast %cst_3 : f32 to vector<6x2048xf32>
    %16 = arith.maximumf %15, %14 : vector<6x2048xf32>
    %17 = vector.broadcast %cst_4 : f32 to vector<6x2048xf32>
    %18 = arith.minimumf %17, %16 : vector<6x2048xf32>
    %cst_5 = arith.constant 1.000000e+00 : f32
    %19 = vector.broadcast %cst_5 : f32 to vector<6x2048xf32>
    %20 = arith.subf %19, %18 : vector<6x2048xf32>
    %cst_6 = arith.constant 1.000000e+00 : f32
    %21 = vector.broadcast %cst_6 : f32 to vector<6x2048xf32>
    %22 = arith.subf %21, %1 : vector<6x2048xf32>
    %cst_7 = arith.constant 1.000000e+00 : f32
    %23 = vector.broadcast %cst_7 : f32 to vector<6x2048xf32>
    %24 = arith.cmpf oeq, %1, %23 : vector<6x2048xf32>
    %cst_8 = arith.constant 0.000000e+00 : f32
    %25 = vector.broadcast %cst_8 : f32 to vector<6x2048xf32>
    %26 = arith.select %24, %9, %25 : vector<6x2048xi1>, vector<6x2048xf32>
    %cst_9 = arith.constant 1.000000e+00 : f32
    %27 = vector.broadcast %cst_9 : f32 to vector<6x2048xf32>
    %28 = arith.cmpf olt, %1, %27 : vector<6x2048xf32>
    %cst_10 = arith.constant 0.000000e+00 : f32
    %29 = vector.broadcast %cst_10 : f32 to vector<6x2048xf32>
    %30 = arith.select %28, %9, %29 : vector<6x2048xi1>, vector<6x2048xf32>
    %31 = arith.mulf %22, %22 : vector<6x2048xf32>
    %32 = arith.mulf %31, %31 : vector<6x2048xf32>
    %33 = math.log %18 : vector<6x2048xf32>
    %34 = arith.mulf %20, %20 : vector<6x2048xf32>
    %35 = arith.mulf %33, %34 : vector<6x2048xf32>
    %36 = arith.mulf %35, %26 : vector<6x2048xf32>
    %37 = math.log %20 : vector<6x2048xf32>
    %38 = arith.mulf %18, %18 : vector<6x2048xf32>
    %39 = arith.mulf %37, %38 : vector<6x2048xf32>
    %40 = arith.mulf %39, %32 : vector<6x2048xf32>
    %41 = arith.mulf %40, %30 : vector<6x2048xf32>
    %42 = vector.shape_cast %36 : vector<6x2048xf32> to vector<1x6x2048xf32>
    %cst_11 = arith.constant dense<0.000000e+00> : vector<1xf32>
    %43 = vector.multi_reduction <add>, %42, %cst_11 [1, 2] : vector<1x6x2048xf32> to vector<1xf32>
    %44 = vector.shape_cast %43 : vector<1xf32> to vector<1x1x1xf32>
    %45 = vector.extract %44[0, 0, 0] : f32 from vector<1x1x1xf32>
    %46 = vector.shape_cast %41 : vector<6x2048xf32> to vector<1x6x2048xf32>
    %cst_12 = arith.constant dense<0.000000e+00> : vector<1xf32>
    %47 = vector.multi_reduction <add>, %46, %cst_12 [1, 2] : vector<1x6x2048xf32> to vector<1xf32>
    %48 = vector.shape_cast %47 : vector<1xf32> to vector<1x1x1xf32>
    %49 = vector.extract %48[0, 0, 0] : f32 from vector<1x1x1xf32>
    %50 = vector.shape_cast %26 : vector<6x2048xf32> to vector<1x6x2048xf32>
    %cst_13 = arith.constant dense<0.000000e+00> : vector<1xf32>
    %51 = vector.multi_reduction <add>, %50, %cst_13 [1, 2] : vector<1x6x2048xf32> to vector<1xf32>
    %52 = vector.shape_cast %51 : vector<1xf32> to vector<1x1x1xf32>
    %53 = vector.extract %52[0, 0, 0] : f32 from vector<1x1x1xf32>
    %c0_i32 = arith.constant 0 : i32
    %54 = arith.cmpi eq, %arg0, %c0_i32 : i32
    %55 = arith.extui %54 : i1 to i32
    %c0_i32_14 = arith.constant 0 : i32
    %56 = arith.cmpi ne, %55, %c0_i32_14 : i32
    scf.if %56 {
      %c0_17 = arith.constant 0 : index
      %c0_18 = arith.constant 0 : index
      %60 = vector.load %arg1[%c0_17, %c0_18] : memref<3x128xf32, #tpu.memory_space<vmem>>, vector<3x128xf32>
      %c0_19 = arith.constant 0 : index
      %c0_20 = arith.constant 0 : index
      %61 = vector.load %arg3[%c0_19, %c0_20] : memref<1x128xf32, #tpu.memory_space<vmem>>, vector<1x128xf32>
      %c0_21 = arith.constant 0 : index
      %c0_22 = arith.constant 0 : index
      %62 = vector.load %arg2[%c0_21, %c0_22] : memref<1x128xi32, #tpu.memory_space<vmem>>, vector<1x128xi32>
      %63 = tpu.iota {dimensions = array<i32: 0>} : vector<3x128xi32>
      %64 = vector.broadcast %62 : vector<1x128xi32> to vector<3x128xi32>
      %65 = arith.cmpi eq, %63, %64 : vector<3x128xi32>
      %66 = arith.extui %65 : vector<3x128xi1> to vector<3x128xi32>
      %67 = arith.sitofp %66 : vector<3x128xi32> to vector<3x128xf32>
      %68 = arith.negf %60 : vector<3x128xf32>
      %69 = math.exp %68 : vector<3x128xf32>
      %cst_23 = arith.constant 1.000000e+00 : f32
      %70 = vector.broadcast %cst_23 : f32 to vector<3x128xf32>
      %71 = arith.addf %70, %69 : vector<3x128xf32>
      %72 = arith.divf %70, %71 : vector<3x128xf32>
      %73 = vector.broadcast %61 : vector<1x128xf32> to vector<3x128xf32>
      %74 = arith.mulf %72, %73 : vector<3x128xf32>
      %cst_24 = arith.constant 0.000000e+00 : f32
      %cst_25 = arith.constant 1.000000e+00 : f32
      %75 = vector.broadcast %cst_24 : f32 to vector<3x128xf32>
      %76 = arith.maximumf %75, %74 : vector<3x128xf32>
      %77 = vector.broadcast %cst_25 : f32 to vector<3x128xf32>
      %78 = arith.minimumf %77, %76 : vector<3x128xf32>
      %79 = math.log %78 : vector<3x128xf32>
      %cst_26 = arith.constant -1.000000e+02 : f32
      %80 = vector.broadcast %cst_26 : f32 to vector<3x128xf32>
      %81 = arith.maximumf %79, %80 : vector<3x128xf32>
      %cst_27 = arith.constant 1.000000e+00 : f32
      %82 = vector.broadcast %cst_27 : f32 to vector<3x128xf32>
      %83 = arith.subf %82, %78 : vector<3x128xf32>
      %84 = math.log %83 : vector<3x128xf32>
      %cst_28 = arith.constant -1.000000e+02 : f32
      %85 = vector.broadcast %cst_28 : f32 to vector<3x128xf32>
      %86 = arith.maximumf %84, %85 : vector<3x128xf32>
      %87 = arith.mulf %67, %81 : vector<3x128xf32>
      %cst_29 = arith.constant 1.000000e+00 : f32
      %88 = vector.broadcast %cst_29 : f32 to vector<3x128xf32>
      %89 = arith.subf %88, %67 : vector<3x128xf32>
      %90 = arith.mulf %89, %86 : vector<3x128xf32>
      %91 = arith.addf %87, %90 : vector<3x128xf32>
      %cst_30 = arith.constant 0.000000e+00 : f32
      %92 = vector.broadcast %cst_30 : f32 to vector<3x128xf32>
      %93 = arith.subf %92, %91 : vector<3x128xf32>
      %94 = arith.mulf %72, %67 : vector<3x128xf32>
      %cst_31 = arith.constant 1.000000e+00 : f32
      %95 = vector.broadcast %cst_31 : f32 to vector<3x128xf32>
      %96 = arith.subf %95, %72 : vector<3x128xf32>
      %cst_32 = arith.constant 1.000000e+00 : f32
      %97 = vector.broadcast %cst_32 : f32 to vector<3x128xf32>
      %98 = arith.subf %97, %67 : vector<3x128xf32>
      %99 = arith.mulf %96, %98 : vector<3x128xf32>
      %100 = arith.addf %94, %99 : vector<3x128xf32>
      %cst_33 = arith.constant 1.000000e+00 : f32
      %101 = vector.broadcast %cst_33 : f32 to vector<3x128xf32>
      %102 = arith.subf %101, %100 : vector<3x128xf32>
      %103 = arith.mulf %102, %102 : vector<3x128xf32>
      %104 = arith.mulf %93, %103 : vector<3x128xf32>
      %cst_34 = arith.constant 2.500000e-01 : f32
      %105 = vector.broadcast %cst_34 : f32 to vector<3x128xf32>
      %106 = arith.mulf %105, %67 : vector<3x128xf32>
      %cst_35 = arith.constant 1.000000e+00 : f32
      %107 = vector.broadcast %cst_35 : f32 to vector<3x128xf32>
      %108 = arith.subf %107, %67 : vector<3x128xf32>
      %cst_36 = arith.constant 7.500000e-01 : f32
      %109 = vector.broadcast %cst_36 : f32 to vector<3x128xf32>
      %110 = arith.mulf %109, %108 : vector<3x128xf32>
      %111 = arith.addf %106, %110 : vector<3x128xf32>
      %112 = arith.mulf %111, %104 : vector<3x128xf32>
      %113 = vector.shape_cast %112 : vector<3x128xf32> to vector<1x3x128xf32>
      %cst_37 = arith.constant dense<0.000000e+00> : vector<1xf32>
      %114 = vector.multi_reduction <add>, %113, %cst_37 [1, 2] : vector<1x3x128xf32> to vector<1xf32>
      %115 = vector.shape_cast %114 : vector<1xf32> to vector<1x1x1xf32>
      %116 = vector.extract %115[0, 0, 0] : f32 from vector<1x1x1xf32>
      %c0_38 = arith.constant 0 : index
      %c0_39 = arith.constant 0 : index
      %117 = vector.load %arg4[%c0_38, %c0_39] : memref<10x10xf32, #tpu.memory_space<vmem>>, vector<10x10xf32>
      %c0_40 = arith.constant 0 : index
      %c0_41 = arith.constant 0 : index
      %118 = vector.load %arg5[%c0_40, %c0_41] : memref<10x10xf32, #tpu.memory_space<vmem>>, vector<10x10xf32>
      %119 = arith.subf %117, %118 : vector<10x10xf32>
      %120 = math.absf %119 : vector<10x10xf32>
      %121 = tpu.iota {dimensions = array<i32: 1>} : vector<10x10xi32>
      %c8_i32 = arith.constant 8 : i32
      %122 = vector.broadcast %c8_i32 : i32 to vector<10x10xi32>
      %123 = arith.cmpi slt, %121, %122 : vector<10x10xi32>
      %cst_42 = arith.constant 1.000000e+00 : f32
      %124 = vector.broadcast %cst_42 : f32 to vector<10x10xf32>
      %125 = arith.cmpf olt, %120, %124 : vector<10x10xf32>
      %cst_43 = arith.constant 5.000000e-01 : f32
      %126 = vector.broadcast %cst_43 : f32 to vector<10x10xf32>
      %127 = arith.mulf %126, %119 : vector<10x10xf32>
      %128 = arith.mulf %127, %119 : vector<10x10xf32>
      %cst_44 = arith.constant 5.000000e-01 : f32
      %129 = vector.broadcast %cst_44 : f32 to vector<10x10xf32>
      %130 = arith.subf %120, %129 : vector<10x10xf32>
      %131 = arith.select %125, %128, %130 : vector<10x10xi1>, vector<10x10xf32>
      %cst_45 = arith.constant 0.000000e+00 : f32
      %132 = vector.broadcast %cst_45 : f32 to vector<10x10xf32>
      %133 = arith.select %123, %131, %132 : vector<10x10xi1>, vector<10x10xf32>
      %134 = vector.shape_cast %133 : vector<10x10xf32> to vector<1x10x10xf32>
      %cst_46 = arith.constant dense<0.000000e+00> : vector<1xf32>
      %135 = vector.multi_reduction <add>, %134, %cst_46 [1, 2] : vector<1x10x10xf32> to vector<1xf32>
      %136 = vector.shape_cast %135 : vector<1xf32> to vector<1x1x1xf32>
      %137 = vector.extract %136[0, 0, 0] : f32 from vector<1x1x1xf32>
      %cst_47 = arith.constant 0.000000e+00 : f32
      %138 = vector.broadcast %cst_47 : f32 to vector<10x10xf32>
      %139 = arith.select %123, %138, %120 : vector<10x10xi1>, vector<10x10xf32>
      %140 = vector.shape_cast %139 : vector<10x10xf32> to vector<1x10x10xf32>
      %cst_48 = arith.constant dense<0.000000e+00> : vector<1xf32>
      %141 = vector.multi_reduction <add>, %140, %cst_48 [1, 2] : vector<1x10x10xf32> to vector<1xf32>
      %142 = vector.shape_cast %141 : vector<1xf32> to vector<1x1x1xf32>
      %143 = vector.extract %142[0, 0, 0] : f32 from vector<1x1x1xf32>
      %144 = tpu.iota {dimensions = array<i32: 1>} : vector<8x128xi32>
      %145 = tpu.iota {dimensions = array<i32: 0>} : vector<8x128xi32>
      %cst_49 = arith.constant 0.000000e+00 : f32
      %146 = vector.broadcast %cst_49 : f32 to vector<8x128xf32>
      %c0_i32_50 = arith.constant 0 : i32
      %147 = vector.broadcast %c0_i32_50 : i32 to vector<8x128xi32>
      %148 = arith.cmpi eq, %145, %147 : vector<8x128xi32>
      %c0_i32_51 = arith.constant 0 : i32
      %149 = vector.broadcast %c0_i32_51 : i32 to vector<8x128xi32>
      %150 = arith.cmpi eq, %144, %149 : vector<8x128xi32>
      %151 = arith.andi %148, %150 : vector<8x128xi1>
      %cst_52 = arith.constant 0.000000e+00 : f32
      %152 = vector.broadcast %45 : f32 to vector<8x128xf32>
      %153 = vector.broadcast %cst_52 : f32 to vector<8x128xf32>
      %154 = arith.select %151, %152, %153 : vector<8x128xi1>, vector<8x128xf32>
      %155 = arith.addf %146, %154 : vector<8x128xf32>
      %c0_i32_53 = arith.constant 0 : i32
      %156 = vector.broadcast %c0_i32_53 : i32 to vector<8x128xi32>
      %157 = arith.cmpi eq, %145, %156 : vector<8x128xi32>
      %c1_i32 = arith.constant 1 : i32
      %158 = vector.broadcast %c1_i32 : i32 to vector<8x128xi32>
      %159 = arith.cmpi eq, %144, %158 : vector<8x128xi32>
      %160 = arith.andi %157, %159 : vector<8x128xi1>
      %cst_54 = arith.constant 0.000000e+00 : f32
      %161 = vector.broadcast %49 : f32 to vector<8x128xf32>
      %162 = vector.broadcast %cst_54 : f32 to vector<8x128xf32>
      %163 = arith.select %160, %161, %162 : vector<8x128xi1>, vector<8x128xf32>
      %164 = arith.addf %155, %163 : vector<8x128xf32>
      %c0_i32_55 = arith.constant 0 : i32
      %165 = vector.broadcast %c0_i32_55 : i32 to vector<8x128xi32>
      %166 = arith.cmpi eq, %145, %165 : vector<8x128xi32>
      %c2_i32 = arith.constant 2 : i32
      %167 = vector.broadcast %c2_i32 : i32 to vector<8x128xi32>
      %168 = arith.cmpi eq, %144, %167 : vector<8x128xi32>
      %169 = arith.andi %166, %168 : vector<8x128xi1>
      %cst_56 = arith.constant 0.000000e+00 : f32
      %170 = vector.broadcast %53 : f32 to vector<8x128xf32>
      %171 = vector.broadcast %cst_56 : f32 to vector<8x128xf32>
      %172 = arith.select %169, %170, %171 : vector<8x128xi1>, vector<8x128xf32>
      %173 = arith.addf %164, %172 : vector<8x128xf32>
      %c0_i32_57 = arith.constant 0 : i32
      %174 = vector.broadcast %c0_i32_57 : i32 to vector<8x128xi32>
      %175 = arith.cmpi eq, %145, %174 : vector<8x128xi32>
      %c3_i32 = arith.constant 3 : i32
      %176 = vector.broadcast %c3_i32 : i32 to vector<8x128xi32>
      %177 = arith.cmpi eq, %144, %176 : vector<8x128xi32>
      %178 = arith.andi %175, %177 : vector<8x128xi1>
      %cst_58 = arith.constant 0.000000e+00 : f32
      %179 = vector.broadcast %116 : f32 to vector<8x128xf32>
      %180 = vector.broadcast %cst_58 : f32 to vector<8x128xf32>
      %181 = arith.select %178, %179, %180 : vector<8x128xi1>, vector<8x128xf32>
      %182 = arith.addf %173, %181 : vector<8x128xf32>
      %c0_i32_59 = arith.constant 0 : i32
      %183 = vector.broadcast %c0_i32_59 : i32 to vector<8x128xi32>
      %184 = arith.cmpi eq, %145, %183 : vector<8x128xi32>
      %c4_i32 = arith.constant 4 : i32
      %185 = vector.broadcast %c4_i32 : i32 to vector<8x128xi32>
      %186 = arith.cmpi eq, %144, %185 : vector<8x128xi32>
      %187 = arith.andi %184, %186 : vector<8x128xi1>
      %cst_60 = arith.constant 0.000000e+00 : f32
      %188 = vector.broadcast %137 : f32 to vector<8x128xf32>
      %189 = vector.broadcast %cst_60 : f32 to vector<8x128xf32>
      %190 = arith.select %187, %188, %189 : vector<8x128xi1>, vector<8x128xf32>
      %191 = arith.addf %182, %190 : vector<8x128xf32>
      %c0_i32_61 = arith.constant 0 : i32
      %192 = vector.broadcast %c0_i32_61 : i32 to vector<8x128xi32>
      %193 = arith.cmpi eq, %145, %192 : vector<8x128xi32>
      %c5_i32 = arith.constant 5 : i32
      %194 = vector.broadcast %c5_i32 : i32 to vector<8x128xi32>
      %195 = arith.cmpi eq, %144, %194 : vector<8x128xi32>
      %196 = arith.andi %193, %195 : vector<8x128xi1>
      %cst_62 = arith.constant 0.000000e+00 : f32
      %197 = vector.broadcast %143 : f32 to vector<8x128xf32>
      %198 = vector.broadcast %cst_62 : f32 to vector<8x128xf32>
      %199 = arith.select %196, %197, %198 : vector<8x128xi1>, vector<8x128xf32>
      %200 = arith.addf %191, %199 : vector<8x128xf32>
      %201 = vector.shape_cast %200 : vector<8x128xf32> to vector<1x8x128xf32>
      %c0_63 = arith.constant 0 : index
      %c0_64 = arith.constant 0 : index
      %c0_65 = arith.constant 0 : index
      %202 = vector.load %arg8[%c0_63, %c0_64, %c0_65] : memref<1x8x128xf32, #tpu.memory_space<vmem>>, vector<1x8x128xf32>
      tpu.vector_store %arg8[%c0_63, %c0_64, %c0_65], %201 {strides = array<i32>} : memref<1x8x128xf32, #tpu.memory_space<vmem>>, vector<1x8x128xf32>,
    } else {
    }
    %c0_i32_15 = arith.constant 0 : i32
    %57 = arith.cmpi ne, %arg0, %c0_i32_15 : i32
    %58 = arith.extui %57 : i1 to i32
    %c0_i32_16 = arith.constant 0 : i32
    %59 = arith.cmpi ne, %58, %c0_i32_16 : i32
    scf.if %59 {
      %60 = tpu.iota {dimensions = array<i32: 1>} : vector<8x128xi32>
      %61 = tpu.iota {dimensions = array<i32: 0>} : vector<8x128xi32>
      %cst_17 = arith.constant 0.000000e+00 : f32
      %62 = vector.broadcast %cst_17 : f32 to vector<8x128xf32>
      %c0_i32_18 = arith.constant 0 : i32
      %63 = vector.broadcast %c0_i32_18 : i32 to vector<8x128xi32>
      %64 = arith.cmpi eq, %61, %63 : vector<8x128xi32>
      %c0_i32_19 = arith.constant 0 : i32
      %65 = vector.broadcast %c0_i32_19 : i32 to vector<8x128xi32>
      %66 = arith.cmpi eq, %60, %65 : vector<8x128xi32>
      %67 = arith.andi %64, %66 : vector<8x128xi1>
      %cst_20 = arith.constant 0.000000e+00 : f32
      %68 = vector.broadcast %45 : f32 to vector<8x128xf32>
      %69 = vector.broadcast %cst_20 : f32 to vector<8x128xf32>
      %70 = arith.select %67, %68, %69 : vector<8x128xi1>, vector<8x128xf32>
      %71 = arith.addf %62, %70 : vector<8x128xf32>
      %c0_i32_21 = arith.constant 0 : i32
      %72 = vector.broadcast %c0_i32_21 : i32 to vector<8x128xi32>
      %73 = arith.cmpi eq, %61, %72 : vector<8x128xi32>
      %c1_i32 = arith.constant 1 : i32
      %74 = vector.broadcast %c1_i32 : i32 to vector<8x128xi32>
      %75 = arith.cmpi eq, %60, %74 : vector<8x128xi32>
      %76 = arith.andi %73, %75 : vector<8x128xi1>
      %cst_22 = arith.constant 0.000000e+00 : f32
      %77 = vector.broadcast %49 : f32 to vector<8x128xf32>
      %78 = vector.broadcast %cst_22 : f32 to vector<8x128xf32>
      %79 = arith.select %76, %77, %78 : vector<8x128xi1>, vector<8x128xf32>
      %80 = arith.addf %71, %79 : vector<8x128xf32>
      %c0_i32_23 = arith.constant 0 : i32
      %81 = vector.broadcast %c0_i32_23 : i32 to vector<8x128xi32>
      %82 = arith.cmpi eq, %61, %81 : vector<8x128xi32>
      %c2_i32 = arith.constant 2 : i32
      %83 = vector.broadcast %c2_i32 : i32 to vector<8x128xi32>
      %84 = arith.cmpi eq, %60, %83 : vector<8x128xi32>
      %85 = arith.andi %82, %84 : vector<8x128xi1>
      %cst_24 = arith.constant 0.000000e+00 : f32
      %86 = vector.broadcast %53 : f32 to vector<8x128xf32>
      %87 = vector.broadcast %cst_24 : f32 to vector<8x128xf32>
      %88 = arith.select %85, %86, %87 : vector<8x128xi1>, vector<8x128xf32>
      %89 = arith.addf %80, %88 : vector<8x128xf32>
      %c0_i32_25 = arith.constant 0 : i32
      %90 = vector.broadcast %c0_i32_25 : i32 to vector<8x128xi32>
      %91 = arith.cmpi eq, %61, %90 : vector<8x128xi32>
      %c3_i32 = arith.constant 3 : i32
      %92 = vector.broadcast %c3_i32 : i32 to vector<8x128xi32>
      %93 = arith.cmpi eq, %60, %92 : vector<8x128xi32>
      %94 = arith.andi %91, %93 : vector<8x128xi1>
      %cst_26 = arith.constant 0.000000e+00 : f32
      %cst_27 = arith.constant 0.000000e+00 : f32
      %95 = vector.broadcast %cst_26 : f32 to vector<8x128xf32>
      %96 = vector.broadcast %cst_27 : f32 to vector<8x128xf32>
      %97 = arith.select %94, %95, %96 : vector<8x128xi1>, vector<8x128xf32>
      %98 = arith.addf %89, %97 : vector<8x128xf32>
      %c0_i32_28 = arith.constant 0 : i32
      %99 = vector.broadcast %c0_i32_28 : i32 to vector<8x128xi32>
      %100 = arith.cmpi eq, %61, %99 : vector<8x128xi32>
      %c4_i32 = arith.constant 4 : i32
      %101 = vector.broadcast %c4_i32 : i32 to vector<8x128xi32>
      %102 = arith.cmpi eq, %60, %101 : vector<8x128xi32>
      %103 = arith.andi %100, %102 : vector<8x128xi1>
      %cst_29 = arith.constant 0.000000e+00 : f32
      %cst_30 = arith.constant 0.000000e+00 : f32
      %104 = vector.broadcast %cst_29 : f32 to vector<8x128xf32>
      %105 = vector.broadcast %cst_30 : f32 to vector<8x128xf32>
      %106 = arith.select %103, %104, %105 : vector<8x128xi1>, vector<8x128xf32>
      %107 = arith.addf %98, %106 : vector<8x128xf32>
      %c0_i32_31 = arith.constant 0 : i32
      %108 = vector.broadcast %c0_i32_31 : i32 to vector<8x128xi32>
      %109 = arith.cmpi eq, %61, %108 : vector<8x128xi32>
      %c5_i32 = arith.constant 5 : i32
      %110 = vector.broadcast %c5_i32 : i32 to vector<8x128xi32>
      %111 = arith.cmpi eq, %60, %110 : vector<8x128xi32>
      %112 = arith.andi %109, %111 : vector<8x128xi1>
      %cst_32 = arith.constant 0.000000e+00 : f32
      %cst_33 = arith.constant 0.000000e+00 : f32
      %113 = vector.broadcast %cst_32 : f32 to vector<8x128xf32>
      %114 = vector.broadcast %cst_33 : f32 to vector<8x128xf32>
      %115 = arith.select %112, %113, %114 : vector<8x128xi1>, vector<8x128xf32>
      %116 = arith.addf %107, %115 : vector<8x128xf32>
      %117 = vector.shape_cast %116 : vector<8x128xf32> to vector<1x8x128xf32>
      %c0_34 = arith.constant 0 : index
      %c0_35 = arith.constant 0 : index
      %c0_36 = arith.constant 0 : index
      %118 = vector.load %arg8[%c0_34, %c0_35, %c0_36] : memref<1x8x128xf32, #tpu.memory_space<vmem>>, vector<1x8x128xf32>
      tpu.vector_store %arg8[%c0_34, %c0_35, %c0_36], %117 {strides = array<i32>} : memref<1x8x128xf32, #tpu.memory_space<vmem>>, vector<1x8x128xf32>,
    } else {
    }
    return
  }
  func.func @transform_0(%arg0: i32) -> (i32, i32) {
    %c0_i32 = arith.constant 0 : i32
    %c0_i32_0 = arith.constant 0 : i32
    %c0_i32_1 = arith.constant 0 : i32
    return %c0_i32, %c0_i32_0 : i32, i32
  }
  func.func @transform_1(%arg0: i32) -> (i32, i32) {
    %c0_i32 = arith.constant 0 : i32
    %c0_i32_0 = arith.constant 0 : i32
    %c0_i32_1 = arith.constant 0 : i32
    return %c0_i32, %c0_i32_0 : i32, i32
  }
  func.func @transform_2(%arg0: i32) -> (i32, i32) {
    %c0_i32 = arith.constant 0 : i32
    %c0_i32_0 = arith.constant 0 : i32
    %c0_i32_1 = arith.constant 0 : i32
    return %c0_i32, %c0_i32_0 : i32, i32
  }
  func.func @transform_3(%arg0: i32) -> (i32, i32) {
    %c0_i32 = arith.constant 0 : i32
    %c0_i32_0 = arith.constant 0 : i32
    %c0_i32_1 = arith.constant 0 : i32
    return %c0_i32, %c0_i32_0 : i32, i32
  }
  func.func @transform_4(%arg0: i32) -> (i32, i32) {
    %c0_i32 = arith.constant 0 : i32
    %c0_i32_0 = arith.constant 0 : i32
    %c0_i32_1 = arith.constant 0 : i32
    return %c0_i32, %c0_i32_0 : i32, i32
  }
  func.func @transform_5(%arg0: i32) -> (i32, i32) {
    %c0_i32 = arith.constant 0 : i32
    %c0_i32_0 = arith.constant 0 : i32
    return %c0_i32, %arg0 : i32, i32
  }
  func.func @transform_6(%arg0: i32) -> (i32, i32) {
    %c0_i32 = arith.constant 0 : i32
    %c0_i32_0 = arith.constant 0 : i32
    return %c0_i32, %arg0 : i32, i32
  }
  func.func @transform_7(%arg0: i32) -> (i32, i32, i32) {
    %c0_i32 = arith.constant 0 : i32
    %c0_i32_0 = arith.constant 0 : i32
    %c0_i32_1 = arith.constant 0 : i32
    return %arg0, %c0_i32, %c0_i32_0 : i32, i32, i32
  }
}

</mosaic_0001>

<llo_original>
// kernel: tpu_custom_call.1
$region0: #{tpu_custom_call.1}
  #allocation0 [shape = 'u32[]', space=smem, size = 0x4, offset = 0x4, fixed_abs, tag = 'smem constant byte address 0x4 - core index']
  #allocation1 [shape = 'u32[144,128]{1,0:T(1,128)}', space=vmem, size = 0x12000, scoped, tag = 'internal scratch']
  %s0 = inlined_call_operand.hbm [shape: f32[3,128], index: 0, kind: input, shape index: {}]
  %s1 = inlined_call_operand.vmem [shape: s32[1,128], index: 1, kind: input, shape index: {}]
  %s2 = inlined_call_operand.vmem [shape: f32[1,128], index: 2, kind: input, shape index: {}]
  %s3 = inlined_call_operand.hbm [shape: f32[10,10], index: 3, kind: input, shape index: {}]
  %s4 = inlined_call_operand.hbm [shape: f32[10,10], index: 4, kind: input, shape index: {}]
  %s5 = inlined_call_operand.hbm [shape: f32[6,4096], index: 5, kind: input, shape index: {}]
  %s6 = inlined_call_operand.hbm [shape: f32[6,4096], index: 6, kind: input, shape index: {}]
  %s7 = inlined_call_operand.hbm [shape: f32[2,8,128], index: 7, kind: output, shape index: {}]
  %s8 = sld [smem:[#allocation0]]
  $region89: #{tpu_custom_call.1} parent=0
    _
  %s10 = ssub.s32 1, %s8
  %s11 = scalar_select 0, %s10, %s8
  $region1: #{tpu_custom_call.1} parent=0
    #allocation2 [shape = 'u8[2048]{0}', space=vmem, size = 0x800, scoped, tag = 'input window, operand 0, single buffered']
    #allocation3 [shape = 's32[2]{0}', space=sflag, size = 0x8, scoped, tag = 'scoped memory for tpu_custom_call.1']
    #allocation4 [shape = 's32[2]{0}', space=sflag, size = 0x8, scoped, tag = 'scoped memory for tpu_custom_call.1']
    #allocation5 [shape = 'u8[8192]{0}', space=vmem, size = 0x2000, scoped, tag = 'input window, operand 3, single buffered']
    #allocation6 [shape = 's32[1]{0}', space=sflag, size = 0x4, scoped, tag = 'scoped memory for tpu_custom_call.1']
    #allocation7 [shape = 'u8[8192]{0}', space=vmem, size = 0x2000, scoped, tag = 'input window, operand 4, single buffered']
    #allocation8 [shape = 'u8[131072]{0}', space=vmem, size = 0x20000, scoped, tag = 'input window, operand 5']
    #allocation9 [shape = 's32[2]{0}', space=sflag, size = 0x8, scoped, tag = 'scoped memory for tpu_custom_call.1']
    #allocation10 [shape = 'u8[131072]{0}', space=vmem, size = 0x20000, scoped, tag = 'input window, operand 6']
    #allocation11 [shape = 'u8[8192]{0}', space=vmem, size = 0x2000, scoped, tag = 'output window, operand 0']
    %12 = vsyncpa [#allocation3], 0
    %13 = vsyncpa [#allocation6], 0
    %14 = vsyncpa [#allocation9], 0
    %s15 = scalar_lea.sflag [#allocation9], 1
    %16 = vsyncpa %s15, 0
    %17 = vsyncpa [#allocation4], 0
    %s18 = scalar_lea.sflag [#allocation4], 1
    %19 = vsyncpa %s18, 0
    loop: start=0, step=1, limit=4
    $region2: #{tpu_custom_call.1} parent=1 // loop_pre_header
      _
    $region3: #{tpu_custom_call.1} parent=1 // loop_header
      %s21 = sphi 0, %s25
      %p22 = scmp.ge.s32.totalorder %s21, 4
      %s29 = sphi 0, %s29
      %s31 = sphi 0, %s29
      %s32 = sphi 0, %s31
      %s46 = sphi 0, %s32
      %s50 = sphi 0, %s50
      %s52 = sphi 0, %s50
      %s53 = sphi 0, %s52
      %s67 = sphi 0, %s53
      %s71 = sphi 0, %s71
      %s73 = sphi 0, %s71
      %s74 = sphi 0, %s73
      %s88 = sphi 0, %s74
      %s92 = sphi 0, %s92
      %s94 = sphi 0, %s92
      %s95 = sphi 0, %s94
      %s109 = sphi 0, %s95
      %s113 = sphi 0, %s113
      %s115 = sphi 0, %s113
      %s116 = sphi 0, %s115
      %s130 = sphi 0, %s116
      %s136 = sphi 0, %s138
      %s139 = sphi 0, %s136
      %s140 = sphi 0, %s139
      %s156 = sphi 0, %s140
      %s162 = sphi 0, %s164
      %s165 = sphi 0, %s162
      %s166 = sphi 0, %s165
      %s182 = sphi 0, %s166
      %s188 = sphi 0, %s190
      %s191 = sphi 0, %s188
      %s192 = sphi 0, %s191
      %s208 = sphi 0, %s192
    $region4: #{tpu_custom_call.1} parent=1 // loop_header_branch
      %24 = sbr.rel (%p22) target = $region8
    $region5: #{tpu_custom_call.1} parent=1 // loop_body
      %s26 = ssub.s32 %s21, 1
      %s27 = ssub.s32 %s21, 2
      %s28 = sadd.s32 %s21, 1
      %s30 = sadd.s32 %s29, 1
      %p33 = scmp.eq.s32.totalorder %s21, 1
      %p34 = scmp.ne.s32.totalorder %s29, %s31
      %p35 = scmp.eq.s32.totalorder %s21, 0
      %p36 = por %p34, %p35
      %p37 = scmp.ne.s32.totalorder %s29, %s31
      %p38 = scmp.eq.s32.totalorder %s26, 1
      %p39 = por %p37, %p38
      %p40 = scmp.ne.s32.totalorder %s31, %s32
      %p41 = scmp.eq.s32.totalorder %s26, 0
      %p42 = por %p40, %p41
      %p43 = scmp.ne.s32.totalorder %s31, %s32
      %p44 = scmp.eq.s32.totalorder %s27, 1
      %p45 = por %p43, %p44
      %p47 = scmp.ne.s32.totalorder %s32, %s46
      %p48 = scmp.eq.s32.totalorder %s27, 0
      %p49 = por %p47, %p48
      %s51 = sadd.s32 %s50, 1
      %p54 = scmp.eq.s32.totalorder %s21, 1
      %p55 = scmp.ne.s32.totalorder %s50, %s52
      %p56 = scmp.eq.s32.totalorder %s21, 0
      %p57 = por %p55, %p56
      %p58 = scmp.ne.s32.totalorder %s50, %s52
      %p59 = scmp.eq.s32.totalorder %s26, 1
      %p60 = por %p58, %p59
      %p61 = scmp.ne.s32.totalorder %s52, %s53
      %p62 = scmp.eq.s32.totalorder %s26, 0
      %p63 = por %p61, %p62
      %p64 = scmp.ne.s32.totalorder %s52, %s53
      %p65 = scmp.eq.s32.totalorder %s27, 1
      %p66 = por %p64, %p65
      %p68 = scmp.ne.s32.totalorder %s53, %s67
      %p69 = scmp.eq.s32.totalorder %s27, 0
      %p70 = por %p68, %p69
      %s72 = sadd.s32 %s71, 1
      %p75 = scmp.eq.s32.totalorder %s21, 1
      %p76 = scmp.ne.s32.totalorder %s71, %s73
      %p77 = scmp.eq.s32.totalorder %s21, 0
      %p78 = por %p76, %p77
      %p79 = scmp.ne.s32.totalorder %s71, %s73
      %p80 = scmp.eq.s32.totalorder %s26, 1
      %p81 = por %p79, %p80
      %p82 = scmp.ne.s32.totalorder %s73, %s74
      %p83 = scmp.eq.s32.totalorder %s26, 0
      %p84 = por %p82, %p83
      %p85 = scmp.ne.s32.totalorder %s73, %s74
      %p86 = scmp.eq.s32.totalorder %s27, 1
      %p87 = por %p85, %p86
      %p89 = scmp.ne.s32.totalorder %s74, %s88
      %p90 = scmp.eq.s32.totalorder %s27, 0
      %p91 = por %p89, %p90
      %s93 = sadd.s32 %s92, 1
      %p96 = scmp.eq.s32.totalorder %s21, 1
      %p97 = scmp.ne.s32.totalorder %s92, %s94
      %p98 = scmp.eq.s32.totalorder %s21, 0
      %p99 = por %p97, %p98
      %p100 = scmp.ne.s32.totalorder %s92, %s94
      %p101 = scmp.eq.s32.totalorder %s26, 1
      %p102 = por %p100, %p101
      %p103 = scmp.ne.s32.totalorder %s94, %s95
      %p104 = scmp.eq.s32.totalorder %s26, 0
      %p105 = por %p103, %p104
      %p106 = scmp.ne.s32.totalorder %s94, %s95
      %p107 = scmp.eq.s32.totalorder %s27, 1
      %p108 = por %p106, %p107
      %p110 = scmp.ne.s32.totalorder %s95, %s109
      %p111 = scmp.eq.s32.totalorder %s27, 0
      %p112 = por %p110, %p111
      %s114 = sadd.s32 %s113, 1
      %p117 = scmp.eq.s32.totalorder %s21, 1
      %p118 = scmp.ne.s32.totalorder %s113, %s115
      %p119 = scmp.eq.s32.totalorder %s21, 0
      %p120 = por %p118, %p119
      %p121 = scmp.ne.s32.totalorder %s113, %s115
      %p122 = scmp.eq.s32.totalorder %s26, 1
      %p123 = por %p121, %p122
      %p124 = scmp.ne.s32.totalorder %s115, %s116
      %p125 = scmp.eq.s32.totalorder %s26, 0
      %p126 = por %p124, %p125
      %p127 = scmp.ne.s32.totalorder %s115, %s116
      %p128 = scmp.eq.s32.totalorder %s27, 1
      %p129 = por %p127, %p128
      %p131 = scmp.ne.s32.totalorder %s116, %s130
      %p132 = scmp.eq.s32.totalorder %s27, 0
      %p133 = por %p131, %p132
      %s134 = ssub.s32 %s21, %s28
      %p135 = scmp.eq.s32.totalorder %s134, 0
      %s137 = sadd.s32 %s136, 1
      %s138 = scalar_select %p135, %s136, %s137
      %p141 = pneg %p135
      %p142 = scmp.eq.s32.totalorder %s21, 1
      %p143 = por %p141, %p142
      %p144 = scmp.ne.s32.totalorder %s136, %s139
      %p145 = scmp.eq.s32.totalorder %s21, 0
      %p146 = por %p144, %p145
      %p147 = scmp.ne.s32.totalorder %s136, %s139
      %p148 = scmp.eq.s32.totalorder %s26, 1
      %p149 = por %p147, %p148
      %p150 = scmp.ne.s32.totalorder %s139, %s140
      %p151 = scmp.eq.s32.totalorder %s26, 0
      %p152 = por %p150, %p151
      %p153 = scmp.ne.s32.totalorder %s139, %s140
      %p154 = scmp.eq.s32.totalorder %s27, 1
      %p155 = por %p153, %p154
      %p157 = scmp.ne.s32.totalorder %s140, %s156
      %p158 = scmp.eq.s32.totalorder %s27, 0
      %p159 = por %p157, %p158
      %s160 = ssub.s32 %s21, %s28
      %p161 = scmp.eq.s32.totalorder %s160, 0
      %s163 = sadd.s32 %s162, 1
      %s164 = scalar_select %p161, %s162, %s163
      %p167 = pneg %p161
      %p168 = scmp.eq.s32.totalorder %s21, 1
      %p169 = por %p167, %p168
      %p170 = scmp.ne.s32.totalorder %s162, %s165
      %p171 = scmp.eq.s32.totalorder %s21, 0
      %p172 = por %p170, %p171
      %p173 = scmp.ne.s32.totalorder %s162, %s165
      %p174 = scmp.eq.s32.totalorder %s26, 1
      %p175 = por %p173, %p174
      %p176 = scmp.ne.s32.totalorder %s165, %s166
      %p177 = scmp.eq.s32.totalorder %s26, 0
      %p178 = por %p176, %p177
      %p179 = scmp.ne.s32.totalorder %s165, %s166
      %p180 = scmp.eq.s32.totalorder %s27, 1
      %p181 = por %p179, %p180
      %p183 = scmp.ne.s32.totalorder %s166, %s182
      %p184 = scmp.eq.s32.totalorder %s27, 0
      %p185 = por %p183, %p184
      %s186 = ssub.s32 %s21, %s28
      %p187 = scmp.eq.s32.totalorder %s186, 0
      %s189 = sadd.s32 %s188, 1
      %s190 = scalar_select %p187, %s188, %s189
      %p193 = pneg %p187
      %p194 = scmp.eq.s32.totalorder %s21, 1
      %p195 = por %p193, %p194
      %p196 = scmp.ne.s32.totalorder %s188, %s191
      %p197 = scmp.eq.s32.totalorder %s21, 0
      %p198 = por %p196, %p197
      %p199 = scmp.ne.s32.totalorder %s188, %s191
      %p200 = scmp.eq.s32.totalorder %s26, 1
      %p201 = por %p199, %p200
      %p202 = scmp.ne.s32.totalorder %s191, %s192
      %p203 = scmp.eq.s32.totalorder %s26, 0
      %p204 = por %p202, %p203
      %p205 = scmp.ne.s32.totalorder %s191, %s192
      %p206 = scmp.eq.s32.totalorder %s27, 1
      %p207 = por %p205, %p206
      %p209 = scmp.ne.s32.totalorder %s192, %s208
      %p210 = scmp.eq.s32.totalorder %s27, 0
      %p211 = por %p209, %p210
      %p212 = scmp.le.s32.totalorder 1, %s21
      %p213 = scmp.lt.s32.totalorder %s21, 3
      %p214 = pnand %p212, %p213
      %p215 = pneg %p214
      // Predicated region
      $region9: #{tpu_custom_call.1} parent=5 // pred_check
        _
      $region10: #{tpu_custom_call.1} parent=5 // pred_check_branch
        %217 = sbr.rel (%p214) target = $region12
      $region11: #{tpu_custom_call.1} parent=5 // pred_region
        %s218 = ssub.s32 %s21, 1
        // Predicated region
        $region13: #{tpu_custom_call.1} parent=11 // pred_check
          %p219 = pneg %p42
        $region14: #{tpu_custom_call.1} parent=11 // pred_check_branch
          %221 = sbr.rel (%p219) target = $region16
        $region15: #{tpu_custom_call.1} parent=11 // pred_region
          %s223 = ssub.s32 64, 64
          %224 = vsyncadd [#allocation3], %s223
          %s226 = sshll.u32 [#allocation2], 4
          %s227 = int_to_ptr.vmem [resolvable:$true] %s226
          %229 = dma.hbm_to_vmem [thread:$0]  %s0, 64, %s227, [#allocation3]
        $region16: #{tpu_custom_call.1} parent=11 // pred_fallthru
          _
        // Predicated region
        $region17: #{tpu_custom_call.1} parent=11 // pred_check
          %p230 = pneg %p63
        $region18: #{tpu_custom_call.1} parent=11 // pred_check_branch
          %232 = sbr.rel (%p230) target = $region20
        $region19: #{tpu_custom_call.1} parent=11 // pred_region
          _
        $region20: #{tpu_custom_call.1} parent=11 // pred_fallthru
          _
        // Predicated region
        $region21: #{tpu_custom_call.1} parent=11 // pred_check
          %p233 = pneg %p84
        $region22: #{tpu_custom_call.1} parent=11 // pred_check_branch
          %235 = sbr.rel (%p233) target = $region24
        $region23: #{tpu_custom_call.1} parent=11 // pred_region
          _
        $region24: #{tpu_custom_call.1} parent=11 // pred_fallthru
          _
        // Predicated region
        $region25: #{tpu_custom_call.1} parent=11 // pred_check
          %p236 = pneg %p105
        $region26: #{tpu_custom_call.1} parent=11 // pred_check_branch
          %238 = sbr.rel (%p236) target = $region28
        $region27: #{tpu_custom_call.1} parent=11 // pred_region
          %s240 = ssub.s32 256, 256
          %241 = vsyncadd [#allocation6], %s240
          %s242 = sshll.u32 [#allocation5], 4
          %s243 = int_to_ptr.vmem [resolvable:$true] %s242
          %248 = dma.hbm_to_vmem [thread:$0]  %s3, 256, %s243, [#allocation6], 128, 128, 8
        $region28: #{tpu_custom_call.1} parent=11 // pred_fallthru
          _
        // Predicated region
        $region29: #{tpu_custom_call.1} parent=11 // pred_check
          %p249 = pneg %p126
        $region30: #{tpu_custom_call.1} parent=11 // pred_check_branch
          %251 = sbr.rel (%p249) target = $region32
        $region31: #{tpu_custom_call.1} parent=11 // pred_region
          %s253 = ssub.s32 256, 256
          %254 = vsyncadd [#allocation6], %s253
          %s255 = sshll.u32 [#allocation7], 4
          %s256 = int_to_ptr.vmem [resolvable:$true] %s255
          %261 = dma.hbm_to_vmem [thread:$0]  %s4, 256, %s256, [#allocation6], 128, 128, 8
        $region32: #{tpu_custom_call.1} parent=11 // pred_fallthru
          _
      $region12: #{tpu_custom_call.1} parent=5 // pred_fallthru
        _
      %p262 = scmp.lt.s32.totalorder %s21, 2
      // Predicated region
      $region33: #{tpu_custom_call.1} parent=5 // pred_check
        %p263 = pneg %p262
      $region34: #{tpu_custom_call.1} parent=5 // pred_check_branch
        %265 = sbr.rel (%p263) target = $region36
      $region35: #{tpu_custom_call.1} parent=5 // pred_region
        // Predicated region
        $region37: #{tpu_custom_call.1} parent=35 // pred_check
          %p266 = pneg %p146
        $region38: #{tpu_custom_call.1} parent=35 // pred_check_branch
          %268 = sbr.rel (%p266) target = $region40
        $region39: #{tpu_custom_call.1} parent=35 // pred_region
          %s269 = sand.u32 %s21, 1
          %s270 = scalar_lea.sflag [#allocation9], %s269
          %s271 = sand.u32 %s136, 1
          %s272 = smul.addr %s271, 128
          %s273 = scalar_lea.vmem [#allocation8], %s272
          %s274 = smul.u32 16, %s21
          %s276 = ssub.s32 2048, 2048
          %277 = vsyncadd %s270, %s276
          %s278 = smul.addr %s274, 128
          %s279 = scalar_lea.hbm %s5, %s278
          %s281 = sshll.u32 %s273, 4
          %s282 = int_to_ptr.vmem [resolvable:$true] %s281
          %284 = dma.hbm_to_vmem [thread:$0]  %s279, 2048, %s282, %s270
        $region40: #{tpu_custom_call.1} parent=35 // pred_fallthru
          _
        // Predicated region
        $region41: #{tpu_custom_call.1} parent=35 // pred_check
          %p285 = pneg %p172
        $region42: #{tpu_custom_call.1} parent=35 // pred_check_branch
          %287 = sbr.rel (%p285) target = $region44
        $region43: #{tpu_custom_call.1} parent=35 // pred_region
          %s288 = sand.u32 %s21, 1
          %s289 = scalar_lea.sflag [#allocation9], %s288
          %s290 = sand.u32 %s162, 1
          %s291 = smul.addr %s290, 128
          %s292 = scalar_lea.vmem [#allocation10], %s291
          %s293 = smul.u32 16, %s21
          %s295 = ssub.s32 2048, 2048
          %296 = vsyncadd %s289, %s295
          %s297 = smul.addr %s293, 128
          %s298 = scalar_lea.hbm %s6, %s297
          %s300 = sshll.u32 %s292, 4
          %s301 = int_to_ptr.vmem [resolvable:$true] %s300
          %303 = dma.hbm_to_vmem [thread:$0]  %s298, 2048, %s301, %s289
        $region44: #{tpu_custom_call.1} parent=35 // pred_fallthru
          _
      $region36: #{tpu_custom_call.1} parent=5 // pred_fallthru
        _
      %p304 = scmp.le.s32.totalorder 1, %s21
      %p305 = scmp.lt.s32.totalorder %s21, 3
      %p306 = pnand %p304, %p305
      %p307 = pneg %p306
      // Predicated region
      $region45: #{tpu_custom_call.1} parent=5 // pred_check
        _
      $region46: #{tpu_custom_call.1} parent=5 // pred_check_branch
        %309 = sbr.rel (%p306) target = $region48
      $region47: #{tpu_custom_call.1} parent=5 // pred_region
        %s310 = ssub.s32 %s21, 1
        // Predicated region
        $region49: #{tpu_custom_call.1} parent=47 // pred_check
          %p311 = pneg %p42
        $region50: #{tpu_custom_call.1} parent=47 // pred_check_branch
          %313 = sbr.rel (%p311) target = $region52
        $region51: #{tpu_custom_call.1} parent=47 // pred_region
          %314 = dma.done [#allocation3], 64
        $region52: #{tpu_custom_call.1} parent=47 // pred_fallthru
          _
        // Predicated region
        $region53: #{tpu_custom_call.1} parent=47 // pred_check
          %p315 = pneg %p105
        $region54: #{tpu_custom_call.1} parent=47 // pred_check_branch
          %317 = sbr.rel (%p315) target = $region56
        $region55: #{tpu_custom_call.1} parent=47 // pred_region
          %318 = dma.done [#allocation6], 256
        $region56: #{tpu_custom_call.1} parent=47 // pred_fallthru
          _
        // Predicated region
        $region57: #{tpu_custom_call.1} parent=47 // pred_check
          %p319 = pneg %p126
        $region58: #{tpu_custom_call.1} parent=47 // pred_check_branch
          %321 = sbr.rel (%p319) target = $region60
        $region59: #{tpu_custom_call.1} parent=47 // pred_region
          %322 = dma.done [#allocation6], 256
        $region60: #{tpu_custom_call.1} parent=47 // pred_fallthru
          _
        %s323 = sand.u32 %s26, 1
        %s324 = scalar_lea.sflag [#allocation9], %s323
        %s325 = sand.u32 %s139, 1
        %s326 = smul.addr %s325, 128
        %s327 = scalar_lea.vmem [#allocation8], %s326
        // Predicated region
        $region61: #{tpu_custom_call.1} parent=47 // pred_check
          %p328 = pneg %p152
        $region62: #{tpu_custom_call.1} parent=47 // pred_check_branch
          %330 = sbr.rel (%p328) target = $region64
        $region63: #{tpu_custom_call.1} parent=47 // pred_region
          %331 = dma.done %s324, 2048
        $region64: #{tpu_custom_call.1} parent=47 // pred_fallthru
          _
        %s332 = sand.u32 %s26, 1
        %s333 = scalar_lea.sflag [#allocation9], %s332
        %s334 = sand.u32 %s165, 1
        %s335 = smul.addr %s334, 128
        %s336 = scalar_lea.vmem [#allocation10], %s335
        // Predicated region
        $region65: #{tpu_custom_call.1} parent=47 // pred_check
          %p337 = pneg %p178
        $region66: #{tpu_custom_call.1} parent=47 // pred_check_branch
          %339 = sbr.rel (%p337) target = $region68
        $region67: #{tpu_custom_call.1} parent=47 // pred_region
          %340 = dma.done %s333, 2048
        $region68: #{tpu_custom_call.1} parent=47 // pred_fallthru
          _
        %p341 = pneg %p42
        %p342 = pneg %p39
        %p343 = pneg %p63
        %p344 = pneg %p60
        %p345 = pneg %p84
        %p346 = pneg %p81
        %p347 = pneg %p105
        %p348 = pneg %p102
        %p349 = pneg %p126
        %p350 = pneg %p123
        %s351 = sand.u32 %s26, 1
        %s352 = scalar_lea.sflag [#allocation9], %s351
        %s353 = sand.u32 %s139, 1
        %s354 = smul.addr %s353, 128
        %s355 = scalar_lea.vmem [#allocation8], %s354
        %p356 = pneg %p152
        %p357 = pneg %p149
        %s358 = sand.u32 %s26, 1
        %s359 = scalar_lea.sflag [#allocation9], %s358
        %s360 = sand.u32 %s165, 1
        %s361 = smul.addr %s360, 128
        %s362 = scalar_lea.vmem [#allocation10], %s361
        %p363 = pneg %p178
        %p364 = pneg %p175
        %p365 = pneg %p204
        %p366 = pneg %p201
        %s367 = sand.u32 %s191, 1
        %s368 = scalar_lea.sflag [#allocation4], %s367
        %s369 = sand.u32 %s191, 1
        %s370 = smul.addr %s369, 8
        %s371 = scalar_lea.vmem [#allocation11], %s370
        %s372 = smul.u32 16, %s26
        %s373 = smul.u32 16, %s26
        %v374 = vld [vmem:[%s327] sm:$0x3f]
        %v375 = vld [vmem:[%s327 + $0x8] sm:$0x3f]
        %v376 = vld [vmem:[%s327 + $0x10] sm:$0x3f]
        %v377 = vld [vmem:[%s327 + $0x18] sm:$0x3f]
        %v378 = vld [vmem:[%s327 + $0x20] sm:$0x3f]
        %v379 = vld [vmem:[%s327 + $0x28] sm:$0x3f]
        %v380 = vld [vmem:[%s327 + $0x30] sm:$0x3f]
        %v381 = vld [vmem:[%s327 + $0x38] sm:$0x3f]
        %v382 = vld [vmem:[%s327 + $0x40] sm:$0x3f]
        %v383 = vld [vmem:[%s327 + $0x48] sm:$0x3f]
        %v384 = vld [vmem:[%s327 + $0x50] sm:$0x3f]
        %v385 = vld [vmem:[%s327 + $0x58] sm:$0x3f]
        %v386 = vld [vmem:[%s327 + $0x60] sm:$0x3f]
        %v387 = vld [vmem:[%s327 + $0x68] sm:$0x3f]
        %v388 = vld [vmem:[%s327 + $0x70] sm:$0x3f]
        %v389 = vld [vmem:[%s327 + $0x78] sm:$0x3f]
        %v390 = vld [vmem:[%s336] sm:$0x3f]
        %v391 = vld [vmem:[%s336 + $0x8] sm:$0x3f]
        %v392 = vld [vmem:[%s336 + $0x10] sm:$0x3f]
        %v393 = vld [vmem:[%s336 + $0x18] sm:$0x3f]
        %v394 = vld [vmem:[%s336 + $0x20] sm:$0x3f]
        %v395 = vld [vmem:[%s336 + $0x28] sm:$0x3f]
        %v396 = vld [vmem:[%s336 + $0x30] sm:$0x3f]
        %v397 = vld [vmem:[%s336 + $0x38] sm:$0x3f]
        %v398 = vld [vmem:[%s336 + $0x40] sm:$0x3f]
        %v399 = vld [vmem:[%s336 + $0x48] sm:$0x3f]
        %v400 = vld [vmem:[%s336 + $0x50] sm:$0x3f]
        %v401 = vld [vmem:[%s336 + $0x58] sm:$0x3f]
        %v402 = vld [vmem:[%s336 + $0x60] sm:$0x3f]
        %v403 = vld [vmem:[%s336 + $0x68] sm:$0x3f]
        %v404 = vld [vmem:[%s336 + $0x70] sm:$0x3f]
        %v405 = vld [vmem:[%s336 + $0x78] sm:$0x3f]
        %s406 = smul.u32 %s26, 2048
        %v407 = vlaneseq
        %v408 = vand.u32 %v407, 127
        %v409 = vadd.s32 %v408, 128
        %v410 = vadd.s32 %v408, 256
        %v411 = vadd.s32 %v408, 384
        %v412 = vadd.s32 %v408, 512
        %v413 = vadd.s32 %v408, 640
        %v414 = vadd.s32 %v408, 768
        %v415 = vadd.s32 %v408, 896
        %v416 = vadd.s32 %v408, 1024
        %v417 = vadd.s32 %v408, 1152
        %v418 = vadd.s32 %v408, 1280
        %v419 = vadd.s32 %v408, 1408
        %v420 = vadd.s32 %v408, 1536
        %v421 = vadd.s32 %v408, 1664
        %v422 = vadd.s32 %v408, 1792
        %v423 = vadd.s32 %v408, 1920
        %v424 = vstv %s406
        %v425 = vadd.s32 %v424, %v408
        %v426 = vadd.s32 %v424, %v409
        %v427 = vadd.s32 %v424, %v410
        %v428 = vadd.s32 %v424, %v411
        %v429 = vadd.s32 %v424, %v412
        %v430 = vadd.s32 %v424, %v413
        %v431 = vadd.s32 %v424, %v414
        %v432 = vadd.s32 %v424, %v415
        %v433 = vadd.s32 %v424, %v416
        %v434 = vadd.s32 %v424, %v417
        %v435 = vadd.s32 %v424, %v418
        %v436 = vadd.s32 %v424, %v419
        %v437 = vadd.s32 %v424, %v420
        %v438 = vadd.s32 %v424, %v421
        %v439 = vadd.s32 %v424, %v422
        %v440 = vadd.s32 %v424, %v423
        %vm441 = vcmp.lt.s32.totalorder %v425, 2304
        %vm442 = vcmp.lt.s32.totalorder %v426, 2304
        %vm443 = vcmp.lt.s32.totalorder %v427, 2304
        %vm444 = vcmp.lt.s32.totalorder %v428, 2304
        %vm445 = vcmp.lt.s32.totalorder %v429, 2304
        %vm446 = vcmp.lt.s32.totalorder %v430, 2304
        %vm447 = vcmp.lt.s32.totalorder %v431, 2304
        %vm448 = vcmp.lt.s32.totalorder %v432, 2304
        %vm449 = vcmp.lt.s32.totalorder %v433, 2304
        %vm450 = vcmp.lt.s32.totalorder %v434, 2304
        %vm451 = vcmp.lt.s32.totalorder %v435, 2304
        %vm452 = vcmp.lt.s32.totalorder %v436, 2304
        %vm453 = vcmp.lt.s32.totalorder %v437, 2304
        %vm454 = vcmp.lt.s32.totalorder %v438, 2304
        %vm455 = vcmp.lt.s32.totalorder %v439, 2304
        %vm456 = vcmp.lt.s32.totalorder %v440, 2304
        %v457 = vsel %vm441, 1, 0
        %v458 = vsel %vm442, 1, 0
        %v459 = vsel %vm443, 1, 0
        %v460 = vsel %vm444, 1, 0
        %v461 = vsel %vm445, 1, 0
        %v462 = vsel %vm446, 1, 0
        %v463 = vsel %vm447, 1, 0
        %v464 = vsel %vm448, 1, 0
        %v465 = vsel %vm449, 1, 0
        %v466 = vsel %vm450, 1, 0
        %v467 = vsel %vm451, 1, 0
        %v468 = vsel %vm452, 1, 0
        %v469 = vsel %vm453, 1, 0
        %v470 = vsel %vm454, 1, 0
        %v471 = vsel %vm455, 1, 0
        %v472 = vsel %vm456, 1, 0
        %v473 = vcvt.s32.f32 %v457
        %v474 = vcvt.s32.f32 %v458
        %v475 = vcvt.s32.f32 %v459
        %v476 = vcvt.s32.f32 %v460
        %v477 = vcvt.s32.f32 %v461
        %v478 = vcvt.s32.f32 %v462
        %v479 = vcvt.s32.f32 %v463
        %v480 = vcvt.s32.f32 %v464
        %v481 = vcvt.s32.f32 %v465
        %v482 = vcvt.s32.f32 %v466
        %v483 = vcvt.s32.f32 %v467
        %v484 = vcvt.s32.f32 %v468
        %v485 = vcvt.s32.f32 %v469
        %v486 = vcvt.s32.f32 %v470
        %v487 = vcvt.s32.f32 %v471
        %v488 = vcvt.s32.f32 %v472
        %v489 = vxor.u32 %v374, 2147483648
        %v490 = vxor.u32 %v375, 2147483648
        %v491 = vxor.u32 %v376, 2147483648
        %v492 = vxor.u32 %v377, 2147483648
        %v493 = vxor.u32 %v378, 2147483648
        %v494 = vxor.u32 %v379, 2147483648
        %v495 = vxor.u32 %v380, 2147483648
        %v496 = vxor.u32 %v381, 2147483648
        %v497 = vxor.u32 %v382, 2147483648
        %v498 = vxor.u32 %v383, 2147483648
        %v499 = vxor.u32 %v384, 2147483648
        %v500 = vxor.u32 %v385, 2147483648
        %v501 = vxor.u32 %v386, 2147483648
        %v502 = vxor.u32 %v387, 2147483648
        %v503 = vxor.u32 %v388, 2147483648
        %v504 = vxor.u32 %v389, 2147483648
        %v505 = vmul.f32 %v489, 1.442695
        %v506 = vpow.pop %v505
        %v507 = vmul.f32 %v490, 1.442695
        %v508 = vpow.pop %v507
        %v509 = vmul.f32 %v491, 1.442695
        %v510 = vpow.pop %v509
        %v511 = vmul.f32 %v492, 1.442695
        %v512 = vpow.pop %v511
        %v513 = vmul.f32 %v493, 1.442695
        %v514 = vpow.pop %v513
        %v515 = vmul.f32 %v494, 1.442695
        %v516 = vpow.pop %v515
        %v517 = vmul.f32 %v495, 1.442695
        %v518 = vpow.pop %v517
        %v519 = vmul.f32 %v496, 1.442695
        %v520 = vpow.pop %v519
        %v521 = vmul.f32 %v497, 1.442695
        %v522 = vpow.pop %v521
        %v523 = vmul.f32 %v498, 1.442695
        %v524 = vpow.pop %v523
        %v525 = vmul.f32 %v499, 1.442695
        %v526 = vpow.pop %v525
        %v527 = vmul.f32 %v500, 1.442695
        %v528 = vpow.pop %v527
        %v529 = vmul.f32 %v501, 1.442695
        %v530 = vpow.pop %v529
        %v531 = vmul.f32 %v502, 1.442695
        %v532 = vpow.pop %v531
        %v533 = vmul.f32 %v503, 1.442695
        %v534 = vpow.pop %v533
        %v535 = vmul.f32 %v504, 1.442695
        %v536 = vpow.pop %v535
        %v537 = vadd.f32 %v506, 1.0
        %v538 = vadd.f32 %v508, 1.0
        %v539 = vadd.f32 %v510, 1.0
        %v540 = vadd.f32 %v512, 1.0
        %v541 = vadd.f32 %v514, 1.0
        %v542 = vadd.f32 %v516, 1.0
        %v543 = vadd.f32 %v518, 1.0
        %v544 = vadd.f32 %v520, 1.0
        %v545 = vadd.f32 %v522, 1.0
        %v546 = vadd.f32 %v524, 1.0
        %v547 = vadd.f32 %v526, 1.0
        %v548 = vadd.f32 %v528, 1.0
        %v549 = vadd.f32 %v530, 1.0
        %v550 = vadd.f32 %v532, 1.0
        %v551 = vadd.f32 %v534, 1.0
        %v552 = vadd.f32 %v536, 1.0
        %v553 = vrcp.pop %v537
        %v554 = vmul.f32 1.0, %v553
        %v555 = vrcp.pop %v538
        %v556 = vmul.f32 1.0, %v555
        %v557 = vrcp.pop %v539
        %v558 = vmul.f32 1.0, %v557
        %v559 = vrcp.pop %v540
        %v560 = vmul.f32 1.0, %v559
        %v561 = vrcp.pop %v541
        %v562 = vmul.f32 1.0, %v561
        %v563 = vrcp.pop %v542
        %v564 = vmul.f32 1.0, %v563
        %v565 = vrcp.pop %v543
        %v566 = vmul.f32 1.0, %v565
        %v567 = vrcp.pop %v544
        %v568 = vmul.f32 1.0, %v567
        %v569 = vrcp.pop %v545
        %v570 = vmul.f32 1.0, %v569
        %v571 = vrcp.pop %v546
        %v572 = vmul.f32 1.0, %v571
        %v573 = vrcp.pop %v547
        %v574 = vmul.f32 1.0, %v573
        %v575 = vrcp.pop %v548
        %v576 = vmul.f32 1.0, %v575
        %v577 = vrcp.pop %v549
        %v578 = vmul.f32 1.0, %v577
        %v579 = vrcp.pop %v550
        %v580 = vmul.f32 1.0, %v579
        %v581 = vrcp.pop %v551
        %v582 = vmul.f32 1.0, %v581
        %v583 = vrcp.pop %v552
        %v584 = vmul.f32 1.0, %v583
        %v585 = vmax.f32 %v554, 0.0001
        %v586 = vmax.f32 %v556, 0.0001
        %v587 = vmax.f32 %v558, 0.0001
        %v588 = vmax.f32 %v560, 0.0001
        %v589 = vmax.f32 %v562, 0.0001
        %v590 = vmax.f32 %v564, 0.0001
        %v591 = vmax.f32 %v566, 0.0001
        %v592 = vmax.f32 %v568, 0.0001
        %v593 = vmax.f32 %v570, 0.0001
        %v594 = vmax.f32 %v572, 0.0001
        %v595 = vmax.f32 %v574, 0.0001
        %v596 = vmax.f32 %v576, 0.0001
        %v597 = vmax.f32 %v578, 0.0001
        %v598 = vmax.f32 %v580, 0.0001
        %v599 = vmax.f32 %v582, 0.0001
        %v600 = vmax.f32 %v584, 0.0001
        %v601 = vmin.f32 %v585, 0.9999
        %v602 = vmin.f32 %v586, 0.9999
        %v603 = vmin.f32 %v587, 0.9999
        %v604 = vmin.f32 %v588, 0.9999
        %v605 = vmin.f32 %v589, 0.9999
        %v606 = vmin.f32 %v590, 0.9999
        %v607 = vmin.f32 %v591, 0.9999
        %v608 = vmin.f32 %v592, 0.9999
        %v609 = vmin.f32 %v593, 0.9999
        %v610 = vmin.f32 %v594, 0.9999
        %v611 = vmin.f32 %v595, 0.9999
        %v612 = vmin.f32 %v596, 0.9999
        %v613 = vmin.f32 %v597, 0.9999
        %v614 = vmin.f32 %v598, 0.9999
        %v615 = vmin.f32 %v599, 0.9999
        %v616 = vmin.f32 %v600, 0.9999
        %v617 = vsub.f32 1.0, %v601
        %v618 = vsub.f32 1.0, %v602
        %v619 = vsub.f32 1.0, %v603
        %v620 = vsub.f32 1.0, %v604
        %v621 = vsub.f32 1.0, %v605
        %v622 = vsub.f32 1.0, %v606
        %v623 = vsub.f32 1.0, %v607
        %v624 = vsub.f32 1.0, %v608
        %v625 = vsub.f32 1.0, %v609
        %v626 = vsub.f32 1.0, %v610
        %v627 = vsub.f32 1.0, %v611
        %v628 = vsub.f32 1.0, %v612
        %v629 = vsub.f32 1.0, %v613
        %v630 = vsub.f32 1.0, %v614
        %v631 = vsub.f32 1.0, %v615
        %v632 = vsub.f32 1.0, %v616
        %v633 = vsub.f32 1.0, %v390
        %v634 = vsub.f32 1.0, %v391
        %v635 = vsub.f32 1.0, %v392
        %v636 = vsub.f32 1.0, %v393
        %v637 = vsub.f32 1.0, %v394
        %v638 = vsub.f32 1.0, %v395
        %v639 = vsub.f32 1.0, %v396
        %v640 = vsub.f32 1.0, %v397
        %v641 = vsub.f32 1.0, %v398
        %v642 = vsub.f32 1.0, %v399
        %v643 = vsub.f32 1.0, %v400
        %v644 = vsub.f32 1.0, %v401
        %v645 = vsub.f32 1.0, %v402
        %v646 = vsub.f32 1.0, %v403
        %v647 = vsub.f32 1.0, %v404
        %v648 = vsub.f32 1.0, %v405
        %vm649 = vcmp.eq.f32.partialorder %v390, 1.0
        %vm650 = vcmp.eq.f32.partialorder %v391, 1.0
        %vm651 = vcmp.eq.f32.partialorder %v392, 1.0
        %vm652 = vcmp.eq.f32.partialorder %v393, 1.0
        %vm653 = vcmp.eq.f32.partialorder %v394, 1.0
        %vm654 = vcmp.eq.f32.partialorder %v395, 1.0
        %vm655 = vcmp.eq.f32.partialorder %v396, 1.0
        %vm656 = vcmp.eq.f32.partialorder %v397, 1.0
        %vm657 = vcmp.eq.f32.partialorder %v398, 1.0
        %vm658 = vcmp.eq.f32.partialorder %v399, 1.0
        %vm659 = vcmp.eq.f32.partialorder %v400, 1.0
        %vm660 = vcmp.eq.f32.partialorder %v401, 1.0
        %vm661 = vcmp.eq.f32.partialorder %v402, 1.0
        %vm662 = vcmp.eq.f32.partialorder %v403, 1.0
        %vm663 = vcmp.eq.f32.partialorder %v404, 1.0
        %vm664 = vcmp.eq.f32.partialorder %v405, 1.0
        %v665 = vsel %vm649, %v473, 0.0
        %v666 = vsel %vm650, %v474, 0.0
        %v667 = vsel %vm651, %v475, 0.0
        %v668 = vsel %vm652, %v476, 0.0
        %v669 = vsel %vm653, %v477, 0.0
        %v670 = vsel %vm654, %v478, 0.0
        %v671 = vsel %vm655, %v479, 0.0
        %v672 = vsel %vm656, %v480, 0.0
        %v673 = vsel %vm657, %v481, 0.0
        %v674 = vsel %vm658, %v482, 0.0
        %v675 = vsel %vm659, %v483, 0.0
        %v676 = vsel %vm660, %v484, 0.0
        %v677 = vsel %vm661, %v485, 0.0
        %v678 = vsel %vm662, %v486, 0.0
        %v679 = vsel %vm663, %v487, 0.0
        %v680 = vsel %vm664, %v488, 0.0
        %vm681 = vcmp.lt.f32.partialorder %v390, 1.0
        %vm682 = vcmp.lt.f32.partialorder %v391, 1.0
        %vm683 = vcmp.lt.f32.partialorder %v392, 1.0
        %vm684 = vcmp.lt.f32.partialorder %v393, 1.0
        %vm685 = vcmp.lt.f32.partialorder %v394, 1.0
        %vm686 = vcmp.lt.f32.partialorder %v395, 1.0
        %vm687 = vcmp.lt.f32.partialorder %v396, 1.0
        %vm688 = vcmp.lt.f32.partialorder %v397, 1.0
        %vm689 = vcmp.lt.f32.partialorder %v398, 1.0
        %vm690 = vcmp.lt.f32.partialorder %v399, 1.0
        %vm691 = vcmp.lt.f32.partialorder %v400, 1.0
        %vm692 = vcmp.lt.f32.partialorder %v401, 1.0
        %vm693 = vcmp.lt.f32.partialorder %v402, 1.0
        %vm694 = vcmp.lt.f32.partialorder %v403, 1.0
        %vm695 = vcmp.lt.f32.partialorder %v404, 1.0
        %vm696 = vcmp.lt.f32.partialorder %v405, 1.0
        %v697 = vsel %vm681, %v473, 0.0
        %v698 = vsel %vm682, %v474, 0.0
        %v699 = vsel %vm683, %v475, 0.0
        %v700 = vsel %vm684, %v476, 0.0
        %v701 = vsel %vm685, %v477, 0.0
        %v702 = vsel %vm686, %v478, 0.0
        %v703 = vsel %vm687, %v479, 0.0
        %v704 = vsel %vm688, %v480, 0.0
        %v705 = vsel %vm689, %v481, 0.0
        %v706 = vsel %vm690, %v482, 0.0
        %v707 = vsel %vm691, %v483, 0.0
        %v708 = vsel %vm692, %v484, 0.0
        %v709 = vsel %vm693, %v485, 0.0
        %v710 = vsel %vm694, %v486, 0.0
        %v711 = vsel %vm695, %v487, 0.0
        %v712 = vsel %vm696, %v488, 0.0
        %v713 = vmul.f32 %v633, %v633
        %v714 = vmul.f32 %v634, %v634
        %v715 = vmul.f32 %v635, %v635
        %v716 = vmul.f32 %v636, %v636
        %v717 = vmul.f32 %v637, %v637
        %v718 = vmul.f32 %v638, %v638
        %v719 = vmul.f32 %v639, %v639
        %v720 = vmul.f32 %v640, %v640
        %v721 = vmul.f32 %v641, %v641
        %v722 = vmul.f32 %v642, %v642
        %v723 = vmul.f32 %v643, %v643
        %v724 = vmul.f32 %v644, %v644
        %v725 = vmul.f32 %v645, %v645
        %v726 = vmul.f32 %v646, %v646
        %v727 = vmul.f32 %v647, %v647
        %v728 = vmul.f32 %v648, %v648
        %v729 = vmul.f32 %v713, %v713
        %v730 = vmul.f32 %v714, %v714
        %v731 = vmul.f32 %v715, %v715
        %v732 = vmul.f32 %v716, %v716
        %v733 = vmul.f32 %v717, %v717
        %v734 = vmul.f32 %v718, %v718
        %v735 = vmul.f32 %v719, %v719
        %v736 = vmul.f32 %v720, %v720
        %v737 = vmul.f32 %v721, %v721
        %v738 = vmul.f32 %v722, %v722
        %v739 = vmul.f32 %v723, %v723
        %v740 = vmul.f32 %v724, %v724
        %v741 = vmul.f32 %v725, %v725
        %v742 = vmul.f32 %v726, %v726
        %v743 = vmul.f32 %v727, %v727
        %v744 = vmul.f32 %v728, %v728
        %v745 = vlog2.pop %v601
        %v746 = vmul.f32 %v745, 0.6931472
        %v747 = vlog2.pop %v602
        %v748 = vmul.f32 %v747, 0.6931472
        %v749 = vlog2.pop %v603
        %v750 = vmul.f32 %v749, 0.6931472
        %v751 = vlog2.pop %v604
        %v752 = vmul.f32 %v751, 0.6931472
        %v753 = vlog2.pop %v605
        %v754 = vmul.f32 %v753, 0.6931472
        %v755 = vlog2.pop %v606
        %v756 = vmul.f32 %v755, 0.6931472
        %v757 = vlog2.pop %v607
        %v758 = vmul.f32 %v757, 0.6931472
        %v759 = vlog2.pop %v608
        %v760 = vmul.f32 %v759, 0.6931472
        %v761 = vlog2.pop %v609
        %v762 = vmul.f32 %v761, 0.6931472
        %v763 = vlog2.pop %v610
        %v764 = vmul.f32 %v763, 0.6931472
        %v765 = vlog2.pop %v611
        %v766 = vmul.f32 %v765, 0.6931472
        %v767 = vlog2.pop %v612
        %v768 = vmul.f32 %v767, 0.6931472
        %v769 = vlog2.pop %v613
        %v770 = vmul.f32 %v769, 0.6931472
        %v771 = vlog2.pop %v614
        %v772 = vmul.f32 %v771, 0.6931472
        %v773 = vlog2.pop %v615
        %v774 = vmul.f32 %v773, 0.6931472
        %v775 = vlog2.pop %v616
        %v776 = vmul.f32 %v775, 0.6931472
        %v777 = vmul.f32 %v617, %v617
        %v778 = vmul.f32 %v618, %v618
        %v779 = vmul.f32 %v619, %v619
        %v780 = vmul.f32 %v620, %v620
        %v781 = vmul.f32 %v621, %v621
        %v782 = vmul.f32 %v622, %v622
        %v783 = vmul.f32 %v623, %v623
        %v784 = vmul.f32 %v624, %v624
        %v785 = vmul.f32 %v625, %v625
        %v786 = vmul.f32 %v626, %v626
        %v787 = vmul.f32 %v627, %v627
        %v788 = vmul.f32 %v628, %v628
        %v789 = vmul.f32 %v629, %v629
        %v790 = vmul.f32 %v630, %v630
        %v791 = vmul.f32 %v631, %v631
        %v792 = vmul.f32 %v632, %v632
        %v793 = vmul.f32 %v746, %v777
        %v794 = vmul.f32 %v748, %v778
        %v795 = vmul.f32 %v750, %v779
        %v796 = vmul.f32 %v752, %v780
        %v797 = vmul.f32 %v754, %v781
        %v798 = vmul.f32 %v756, %v782
        %v799 = vmul.f32 %v758, %v783
        %v800 = vmul.f32 %v760, %v784
        %v801 = vmul.f32 %v762, %v785
        %v802 = vmul.f32 %v764, %v786
        %v803 = vmul.f32 %v766, %v787
        %v804 = vmul.f32 %v768, %v788
        %v805 = vmul.f32 %v770, %v789
        %v806 = vmul.f32 %v772, %v790
        %v807 = vmul.f32 %v774, %v791
        %v808 = vmul.f32 %v776, %v792
        %v809 = vmul.f32 %v793, %v665
        %v810 = vmul.f32 %v794, %v666
        %v811 = vmul.f32 %v795, %v667
        %v812 = vmul.f32 %v796, %v668
        %v813 = vmul.f32 %v797, %v669
        %v814 = vmul.f32 %v798, %v670
        %v815 = vmul.f32 %v799, %v671
        %v816 = vmul.f32 %v800, %v672
        %v817 = vmul.f32 %v801, %v673
        %v818 = vmul.f32 %v802, %v674
        %v819 = vmul.f32 %v803, %v675
        %v820 = vmul.f32 %v804, %v676
        %v821 = vmul.f32 %v805, %v677
        %v822 = vmul.f32 %v806, %v678
        %v823 = vmul.f32 %v807, %v679
        %v824 = vmul.f32 %v808, %v680
        %v825 = vlog2.pop %v617
        %v826 = vmul.f32 %v825, 0.6931472
        %v827 = vlog2.pop %v618
        %v828 = vmul.f32 %v827, 0.6931472
        %v829 = vlog2.pop %v619
        %v830 = vmul.f32 %v829, 0.6931472
        %v831 = vlog2.pop %v620
        %v832 = vmul.f32 %v831, 0.6931472
        %v833 = vlog2.pop %v621
        %v834 = vmul.f32 %v833, 0.6931472
        %v835 = vlog2.pop %v622
        %v836 = vmul.f32 %v835, 0.6931472
        %v837 = vlog2.pop %v623
        %v838 = vmul.f32 %v837, 0.6931472
        %v839 = vlog2.pop %v624
        %v840 = vmul.f32 %v839, 0.6931472
        %v841 = vlog2.pop %v625
        %v842 = vmul.f32 %v841, 0.6931472
        %v843 = vlog2.pop %v626
        %v844 = vmul.f32 %v843, 0.6931472
        %v845 = vlog2.pop %v627
        %v846 = vmul.f32 %v845, 0.6931472
        %v847 = vlog2.pop %v628
        %v848 = vmul.f32 %v847, 0.6931472
        %v849 = vlog2.pop %v629
        %v850 = vmul.f32 %v849, 0.6931472
        %v851 = vlog2.pop %v630
        %v852 = vmul.f32 %v851, 0.6931472
        %v853 = vlog2.pop %v631
        %v854 = vmul.f32 %v853, 0.6931472
        %v855 = vlog2.pop %v632
        %v856 = vmul.f32 %v855, 0.6931472
        %v857 = vmul.f32 %v601, %v601
        %v858 = vmul.f32 %v602, %v602
        %v859 = vmul.f32 %v603, %v603
        %v860 = vmul.f32 %v604, %v604
        %v861 = vmul.f32 %v605, %v605
        %v862 = vmul.f32 %v606, %v606
        %v863 = vmul.f32 %v607, %v607
        %v864 = vmul.f32 %v608, %v608
        %v865 = vmul.f32 %v609, %v609
        %v866 = vmul.f32 %v610, %v610
        %v867 = vmul.f32 %v611, %v611
        %v868 = vmul.f32 %v612, %v612
        %v869 = vmul.f32 %v613, %v613
        %v870 = vmul.f32 %v614, %v614
        %v871 = vmul.f32 %v615, %v615
        %v872 = vmul.f32 %v616, %v616
        %v873 = vmul.f32 %v826, %v857
        %v874 = vmul.f32 %v828, %v858
        %v875 = vmul.f32 %v830, %v859
        %v876 = vmul.f32 %v832, %v860
        %v877 = vmul.f32 %v834, %v861
        %v878 = vmul.f32 %v836, %v862
        %v879 = vmul.f32 %v838, %v863
        %v880 = vmul.f32 %v840, %v864
        %v881 = vmul.f32 %v842, %v865
        %v882 = vmul.f32 %v844, %v866
        %v883 = vmul.f32 %v846, %v867
        %v884 = vmul.f32 %v848, %v868
        %v885 = vmul.f32 %v850, %v869
        %v886 = vmul.f32 %v852, %v870
        %v887 = vmul.f32 %v854, %v871
        %v888 = vmul.f32 %v856, %v872
        %v889 = vmul.f32 %v873, %v729
        %v890 = vmul.f32 %v874, %v730
        %v891 = vmul.f32 %v875, %v731
        %v892 = vmul.f32 %v876, %v732
        %v893 = vmul.f32 %v877, %v733
        %v894 = vmul.f32 %v878, %v734
        %v895 = vmul.f32 %v879, %v735
        %v896 = vmul.f32 %v880, %v736
        %v897 = vmul.f32 %v881, %v737
        %v898 = vmul.f32 %v882, %v738
        %v899 = vmul.f32 %v883, %v739
        %v900 = vmul.f32 %v884, %v740
        %v901 = vmul.f32 %v885, %v741
        %v902 = vmul.f32 %v886, %v742
        %v903 = vmul.f32 %v887, %v743
        %v904 = vmul.f32 %v888, %v744
        %v905 = vmul.f32 %v889, %v697
        %v906 = vmul.f32 %v890, %v698
        %v907 = vmul.f32 %v891, %v699
        %v908 = vmul.f32 %v892, %v700
        %v909 = vmul.f32 %v893, %v701
        %v910 = vmul.f32 %v894, %v702
        %v911 = vmul.f32 %v895, %v703
        %v912 = vmul.f32 %v896, %v704
        %v913 = vmul.f32 %v897, %v705
        %v914 = vmul.f32 %v898, %v706
        %v915 = vmul.f32 %v899, %v707
        %v916 = vmul.f32 %v900, %v708
        %v917 = vmul.f32 %v901, %v709
        %v918 = vmul.f32 %v902, %v710
        %v919 = vmul.f32 %v903, %v711
        %v920 = vmul.f32 %v904, %v712
        %vm921 = vcmask 1045504
        %v922 = vsel %vm921, %v809, 0.0
        %v923 = vsel %vm921, %v810, 0.0
        %v924 = vadd.f32 %v922, %v923
        %v925 = vsel %vm921, %v811, 0.0
        %v926 = vadd.f32 %v924, %v925
        %v927 = vsel %vm921, %v812, 0.0
        %v928 = vadd.f32 %v926, %v927
        %v929 = vsel %vm921, %v813, 0.0
        %v930 = vadd.f32 %v928, %v929
        %v931 = vsel %vm921, %v814, 0.0
        %v932 = vadd.f32 %v930, %v931
        %v933 = vsel %vm921, %v815, 0.0
        %v934 = vadd.f32 %v932, %v933
        %v935 = vsel %vm921, %v816, 0.0
        %v936 = vadd.f32 %v934, %v935
        %v937 = vsel %vm921, %v817, 0.0
        %v938 = vadd.f32 %v936, %v937
        %v939 = vsel %vm921, %v818, 0.0
        %v940 = vadd.f32 %v938, %v939
        %v941 = vsel %vm921, %v819, 0.0
        %v942 = vadd.f32 %v940, %v941
        %v943 = vsel %vm921, %v820, 0.0
        %v944 = vadd.f32 %v942, %v943
        %v945 = vsel %vm921, %v821, 0.0
        %v946 = vadd.f32 %v944, %v945
        %v947 = vsel %vm921, %v822, 0.0
        %v948 = vadd.f32 %v946, %v947
        %v949 = vsel %vm921, %v823, 0.0
        %v950 = vadd.f32 %v948, %v949
        %v951 = vsel %vm921, %v824, 0.0
        %v952 = vadd.f32 %v950, %v951
        %953 = vadd.xlane.f32.xlu0 %v952
        %v954 = vpop.xlane.xlu0 %953
        %v955 = vrot.slane %v954, 4
        %v956 = vadd.f32 %v954, %v955
        %v957 = vrot.slane %v956, 2
        %v958 = vadd.f32 %v956, %v957
        %v959 = vrot.slane %v958, 1
        %v960 = vadd.f32 %v958, %v959
        %s961 = vtos %v960
        %v962 = vsel %vm921, %v905, 0.0
        %v963 = vsel %vm921, %v906, 0.0
        %v964 = vadd.f32 %v962, %v963
        %v965 = vsel %vm921, %v907, 0.0
        %v966 = vadd.f32 %v964, %v965
        %v967 = vsel %vm921, %v908, 0.0
        %v968 = vadd.f32 %v966, %v967
        %v969 = vsel %vm921, %v909, 0.0
        %v970 = vadd.f32 %v968, %v969
        %v971 = vsel %vm921, %v910, 0.0
        %v972 = vadd.f32 %v970, %v971
        %v973 = vsel %vm921, %v911, 0.0
        %v974 = vadd.f32 %v972, %v973
        %v975 = vsel %vm921, %v912, 0.0
        %v976 = vadd.f32 %v974, %v975
        %v977 = vsel %vm921, %v913, 0.0
        %v978 = vadd.f32 %v976, %v977
        %v979 = vsel %vm921, %v914, 0.0
        %v980 = vadd.f32 %v978, %v979
        %v981 = vsel %vm921, %v915, 0.0
        %v982 = vadd.f32 %v980, %v981
        %v983 = vsel %vm921, %v916, 0.0
        %v984 = vadd.f32 %v982, %v983
        %v985 = vsel %vm921, %v917, 0.0
        %v986 = vadd.f32 %v984, %v985
        %v987 = vsel %vm921, %v918, 0.0
        %v988 = vadd.f32 %v986, %v987
        %v989 = vsel %vm921, %v919, 0.0
        %v990 = vadd.f32 %v988, %v989
        %v991 = vsel %vm921, %v920, 0.0
        %v992 = vadd.f32 %v990, %v991
        %993 = vadd.xlane.f32.xlu0 %v992
        %v994 = vpop.xlane.xlu0 %993
        %v995 = vrot.slane %v994, 4
        %v996 = vadd.f32 %v994, %v995
        %v997 = vrot.slane %v996, 2
        %v998 = vadd.f32 %v996, %v997
        %v999 = vrot.slane %v998, 1
        %v1000 = vadd.f32 %v998, %v999
        %s1001 = vtos %v1000
        %v1002 = vsel %vm921, %v665, 0.0
        %v1003 = vsel %vm921, %v666, 0.0
        %v1004 = vadd.f32 %v1002, %v1003
        %v1005 = vsel %vm921, %v667, 0.0
        %v1006 = vadd.f32 %v1004, %v1005
        %v1007 = vsel %vm921, %v668, 0.0
        %v1008 = vadd.f32 %v1006, %v1007
        %v1009 = vsel %vm921, %v669, 0.0
        %v1010 = vadd.f32 %v1008, %v1009
        %v1011 = vsel %vm921, %v670, 0.0
        %v1012 = vadd.f32 %v1010, %v1011
        %v1013 = vsel %vm921, %v671, 0.0
        %v1014 = vadd.f32 %v1012, %v1013
        %v1015 = vsel %vm921, %v672, 0.0
        %v1016 = vadd.f32 %v1014, %v1015
        %v1017 = vsel %vm921, %v673, 0.0
        %v1018 = vadd.f32 %v1016, %v1017
        %v1019 = vsel %vm921, %v674, 0.0
        %v1020 = vadd.f32 %v1018, %v1019
        %v1021 = vsel %vm921, %v675, 0.0
        %v1022 = vadd.f32 %v1020, %v1021
        %v1023 = vsel %vm921, %v676, 0.0
        %v1024 = vadd.f32 %v1022, %v1023
        %v1025 = vsel %vm921, %v677, 0.0
        %v1026 = vadd.f32 %v1024, %v1025
        %v1027 = vsel %vm921, %v678, 0.0
        %v1028 = vadd.f32 %v1026, %v1027
        %v1029 = vsel %vm921, %v679, 0.0
        %v1030 = vadd.f32 %v1028, %v1029
        %v1031 = vsel %vm921, %v680, 0.0
        %v1032 = vadd.f32 %v1030, %v1031
        %1033 = vadd.xlane.f32.xlu0 %v1032
        %v1034 = vpop.xlane.xlu0 %1033
        %v1035 = vrot.slane %v1034, 4
        %v1036 = vadd.f32 %v1034, %v1035
        %v1037 = vrot.slane %v1036, 2
        %v1038 = vadd.f32 %v1036, %v1037
        %v1039 = vrot.slane %v1038, 1
        %v1040 = vadd.f32 %v1038, %v1039
        %s1041 = vtos %v1040
        %p1042 = scmp.eq.s32.totalorder %s26, 0
        // Predicated region
        $region69: #{tpu_custom_call.1} parent=47 // pred_check
          %p1043 = pneg %p1042
        $region70: #{tpu_custom_call.1} parent=47 // pred_check_branch
          %1045 = sbr.rel (%p1043) target = $region72
        $region71: #{tpu_custom_call.1} parent=47 // pred_region
          %v1046 = vld [vmem:[#allocation2] sm:$0x7]
          %v1047 = vld [vmem:[%s2] sm:$0x1]
          %v1048 = vld [vmem:[%s1] sm:$0x1]
          %v1049 = vlaneseq
          %v1050 = vshrl.u32 %v1049, 7
          %v1051 = vlaneseq
          %v1052 = vshrl.u32 %v1051, 7
          %v1053 = vsub.s32 0, %v1052
          %v1054 = vrot.slane %v1048, %v1053
          %vm1055 = vcmp.eq.s32.totalorder %v1050, %v1054
          %v1056 = vsel %vm1055, 1, 0
          %v1057 = vcvt.s32.f32 %v1056
          %v1058 = vxor.u32 %v1046, 2147483648
          %v1059 = vmul.f32 %v1058, 1.442695
          %v1060 = vpow.pop %v1059
          %v1061 = vadd.f32 %v1060, 1.0
          %v1062 = vrcp.pop %v1061
          %v1063 = vmul.f32 1.0, %v1062
          %v1065 = vlaneseq
          %v1066 = vshrl.u32 %v1065, 7
          %v1067 = vsub.s32 0, %v1066
          %v1068 = vrot.slane %v1047, %v1067
          %v1070 = vmul.f32 %v1063, %v1068
          %v1071 = vmax.f32 %v1070, 0.0
          %v1072 = vmin.f32 %v1071, 1.0
          %v1073 = vlog2.pop %v1072
          %v1074 = vmul.f32 %v1073, 0.6931472
          %v1075 = vmax.f32 %v1074, -100.0
          %v1076 = vsub.f32 1.0, %v1072
          %v1077 = vlog2.pop %v1076
          %v1078 = vmul.f32 %v1077, 0.6931472
          %v1079 = vmax.f32 %v1078, -100.0
          %v1080 = vmul.f32 %v1057, %v1075
          %v1081 = vsub.f32 1.0, %v1057
          %v1082 = vmul.f32 %v1081, %v1079
          %v1083 = vadd.f32 %v1080, %v1082
          %v1084 = vsub.f32 0.0, %v1083
          %v1085 = vmul.f32 %v1063, %v1057
          %v1086 = vsub.f32 1.0, %v1063
          %v1087 = vmul.f32 %v1086, %v1081
          %v1088 = vadd.f32 %v1085, %v1087
          %v1089 = vsub.f32 1.0, %v1088
          %v1090 = vmul.f32 %v1089, %v1089
          %v1091 = vmul.f32 %v1084, %v1090
          %v1092 = vmul.f32 %v1057, 0.25
          %v1093 = vmul.f32 %v1081, 0.75
          %v1094 = vadd.f32 %v1092, %v1093
          %v1095 = vmul.f32 %v1094, %v1091
          %vm1096 = vcmask 1042432
          %v1097 = vsel %vm1096, %v1095, 0.0
          %1098 = vadd.xlane.f32.xlu0 %v1097
          %v1099 = vpop.xlane.xlu0 %1098
          %v1100 = vrot.slane %v1099, 4
          %v1101 = vadd.f32 %v1099, %v1100
          %v1102 = vrot.slane %v1101, 2
          %v1103 = vadd.f32 %v1101, %v1102
          %v1104 = vrot.slane %v1103, 1
          %v1105 = vadd.f32 %v1103, %v1104
          %s1106 = vtos %v1105
          %v1107 = vld [vmem:[#allocation5] sm:$0xff]
          %v1108 = vld [vmem:[#allocation5 + $0x8] sm:$0x3]
          %v1109 = vld [vmem:[#allocation7] sm:$0xff]
          %v1110 = vld [vmem:[#allocation7 + $0x8] sm:$0x3]
          %v1111 = vsub.f32 %v1107, %v1109
          %v1112 = vsub.f32 %v1108, %v1110
          %v1113 = vand.u32 2147483647, %v1111
          %v1114 = vand.u32 2147483647, %v1112
          %vm1115 = vcmp.lt.s32.totalorder %v408, 8
          %vm1116 = vcmp.lt.f32.partialorder %v1113, 1.0
          %vm1117 = vcmp.lt.f32.partialorder %v1114, 1.0
          %v1118 = vmul.f32 %v1111, 0.5
          %v1119 = vmul.f32 %v1112, 0.5
          %v1120 = vmul.f32 %v1118, %v1111
          %v1121 = vmul.f32 %v1119, %v1112
          %v1122 = vsub.f32 %v1113, 0.5
          %v1123 = vsub.f32 %v1114, 0.5
          %v1124 = vsel %vm1116, %v1120, %v1122
          %v1125 = vsel %vm1117, %v1121, %v1123
          %v1126 = vsel %vm1115, %v1124, 0.0
          %v1127 = vsel %vm1115, %v1125, 0.0
          %vm1128 = vcmask 80896
          %v1129 = vsel %vm1128, %v1126, 0.0
          %vm1130 = vcmask 74752
          %v1131 = vsel %vm1130, %v1127, 0.0
          %v1132 = vadd.f32 %v1129, %v1131
          %1133 = vadd.xlane.f32.xlu0 %v1132
          %v1134 = vpop.xlane.xlu0 %1133
          %v1135 = vrot.slane %v1134, 4
          %v1136 = vadd.f32 %v1134, %v1135
          %v1137 = vrot.slane %v1136, 2
          %v1138 = vadd.f32 %v1136, %v1137
          %v1139 = vrot.slane %v1138, 1
          %v1140 = vadd.f32 %v1138, %v1139
          %s1141 = vtos %v1140
          %v1142 = vsel %vm1115, 0.0, %v1113
          %v1143 = vsel %vm1115, 0.0, %v1114
          %v1144 = vsel %vm1128, %v1142, 0.0
          %v1145 = vsel %vm1130, %v1143, 0.0
          %v1146 = vadd.f32 %v1144, %v1145
          %1147 = vadd.xlane.f32.xlu0 %v1146
          %v1148 = vpop.xlane.xlu0 %1147
          %v1149 = vrot.slane %v1148, 4
          %v1150 = vadd.f32 %v1148, %v1149
          %v1151 = vrot.slane %v1150, 2
          %v1152 = vadd.f32 %v1150, %v1151
          %v1153 = vrot.slane %v1152, 1
          %v1154 = vadd.f32 %v1152, %v1153
          %s1155 = vtos %v1154
          %vm1156 = vcmp.eq.s32.totalorder %v1050, 0
          %vm1157 = vcmp.eq.s32.totalorder %v408, 0
          %vm1158 = vmand %vm1156, %vm1157
          %v1159 = vstv %s961
          %v1160 = vsel %vm1158, %v1159, 0.0
          %v1161 = vadd.f32 %v1160, 0.0
          %vm1162 = vcmp.eq.s32.totalorder %v408, 1
          %vm1163 = vmand %vm1156, %vm1162
          %v1164 = vstv %s1001
          %v1165 = vsel %vm1163, %v1164, 0.0
          %v1166 = vadd.f32 %v1161, %v1165
          %vm1167 = vcmp.eq.s32.totalorder %v408, 2
          %vm1168 = vmand %vm1156, %vm1167
          %v1169 = vstv %s1041
          %v1170 = vsel %vm1168, %v1169, 0.0
          %v1171 = vadd.f32 %v1166, %v1170
          %vm1172 = vcmp.eq.s32.totalorder %v408, 3
          %vm1173 = vmand %vm1156, %vm1172
          %v1174 = vstv %s1106
          %v1175 = vsel %vm1173, %v1174, 0.0
          %v1176 = vadd.f32 %v1171, %v1175
          %vm1177 = vcmp.eq.s32.totalorder %v408, 4
          %vm1178 = vmand %vm1156, %vm1177
          %v1179 = vstv %s1141
          %v1180 = vsel %vm1178, %v1179, 0.0
          %v1181 = vadd.f32 %v1176, %v1180
          %vm1182 = vcmp.eq.s32.totalorder %v408, 5
          %vm1183 = vmand %vm1156, %vm1182
          %v1184 = vstv %s1155
          %v1185 = vsel %vm1183, %v1184, 0.0
          %v1186 = vadd.f32 %v1181, %v1185
          %1187 = vst [vmem:[%s371] sm:$0xff] %v1186
        $region72: #{tpu_custom_call.1} parent=47 // pred_fallthru
          _
        %p1188 = scmp.ne.s32.totalorder %s26, 0
        // Predicated region
        $region73: #{tpu_custom_call.1} parent=47 // pred_check
          %p1189 = pneg %p1188
        $region74: #{tpu_custom_call.1} parent=47 // pred_check_branch
          %1191 = sbr.rel (%p1189) target = $region76
        $region75: #{tpu_custom_call.1} parent=47 // pred_region
          %v1192 = vlaneseq
          %v1193 = vshrl.u32 %v1192, 7
          %vm1194 = vcmp.eq.s32.totalorder %v1193, 0
          %vm1195 = vcmp.eq.s32.totalorder %v408, 0
          %vm1196 = vmand %vm1194, %vm1195
          %v1197 = vstv %s961
          %v1198 = vsel %vm1196, %v1197, 0.0
          %v1199 = vadd.f32 %v1198, 0.0
          %vm1200 = vcmp.eq.s32.totalorder %v408, 1
          %vm1201 = vmand %vm1194, %vm1200
          %v1202 = vstv %s1001
          %v1203 = vsel %vm1201, %v1202, 0.0
          %v1204 = vadd.f32 %v1199, %v1203
          %vm1205 = vcmp.eq.s32.totalorder %v408, 2
          %vm1206 = vmand %vm1194, %vm1205
          %v1207 = vstv %s1041
          %v1208 = vsel %vm1206, %v1207, 0.0
          %v1209 = vadd.f32 %v1204, %v1208
          %v1210 = vadd.f32 %v1209, 0.0
          %v1211 = vadd.f32 %v1210, 0.0
          %v1212 = vadd.f32 %v1211, 0.0
          %1213 = vst [vmem:[%s371] sm:$0xff] %v1212
        $region76: #{tpu_custom_call.1} parent=47 // pred_fallthru
          _
        %s1214 = sand.u32 %s191, 1
        %s1215 = scalar_lea.sflag [#allocation4], %s1214
        %s1216 = sand.u32 %s191, 1
        %s1217 = smul.addr %s1216, 8
        %s1218 = scalar_lea.vmem [#allocation11], %s1217
        // Predicated region
        $region77: #{tpu_custom_call.1} parent=47 // pred_check
          %p1219 = pneg %p201
        $region78: #{tpu_custom_call.1} parent=47 // pred_check_branch
          %1221 = sbr.rel (%p1219) target = $region80
        $region79: #{tpu_custom_call.1} parent=47 // pred_region
          %s1223 = ssub.s32 128, 128
          %1224 = vsyncadd %s1215, %s1223
          %s1225 = smul.addr %s26, 128
          %s1226 = scalar_lea.hbm %s7, %s1225
          %s1228 = sshll.u32 %s1218, 4
          %s1229 = int_to_ptr.vmem [resolvable:$true] %s1228
          %1231 = dma.vmem_to_hbm [thread:$0]  %s1229, 128, %s1226, %s1215
        $region80: #{tpu_custom_call.1} parent=47 // pred_fallthru
          _
      $region48: #{tpu_custom_call.1} parent=5 // pred_fallthru
        _
      %p1232 = scmp.le.s32.totalorder 2, %s21
      // Predicated region
      $region81: #{tpu_custom_call.1} parent=5 // pred_check
        %p1233 = pneg %p1232
      $region82: #{tpu_custom_call.1} parent=5 // pred_check_branch
        %1235 = sbr.rel (%p1233) target = $region84
      $region83: #{tpu_custom_call.1} parent=5 // pred_region
        %s1236 = ssub.s32 %s21, 2
        // Predicated region
        $region85: #{tpu_custom_call.1} parent=83 // pred_check
          %p1237 = pneg %p207
        $region86: #{tpu_custom_call.1} parent=83 // pred_check_branch
          %1239 = sbr.rel (%p1237) target = $region88
        $region87: #{tpu_custom_call.1} parent=83 // pred_region
          %s1240 = sand.u32 %s192, 1
          %s1241 = scalar_lea.sflag [#allocation4], %s1240
          %s1242 = sand.u32 %s192, 1
          %s1243 = smul.addr %s1242, 8
          %s1244 = scalar_lea.vmem [#allocation11], %s1243
          %1245 = dma.done %s1241, 128
        $region88: #{tpu_custom_call.1} parent=83 // pred_fallthru
          _
      $region84: #{tpu_custom_call.1} parent=5 // pred_fallthru
        _
    $region6: #{tpu_custom_call.1} parent=1 // loop_footer
      %s25 = sadd.s32 1, %s21
    $region7: #{tpu_custom_call.1} parent=1 // loop_footer_branch
      %20 = sbr.rel target = $region3
    $region8: #{tpu_custom_call.1} parent=1 // loop_exit
      _
    %1246 = vsyncpa [#allocation3], 1
    %s1247 = scalar_lea.sflag [#allocation3], 1
    %1248 = vsyncpa %s1247, 1
    %1249 = vsyncpa [#allocation6], 1
    %1250 = vsyncpa [#allocation9], 1
    %s1251 = scalar_lea.sflag [#allocation9], 1
    %1252 = vsyncpa %s1251, 1
    %1253 = vsyncpa [#allocation4], 1
    %s1254 = scalar_lea.sflag [#allocation4], 1
    %1255 = vsyncpa %s1254, 1

</llo_original>
